<compile_context>
chip_gen: v7x
topology: tpu7x:2x2x1
jax: 0.10.0
libtpu: 0.0.40
codegen_flags: <defaults>
</compile_context>

<pallas_src>
import functools

import jax
import jax.numpy as jnp
import numpy as np
from jax import lax
from jax.experimental import pallas as pl
from jax.experimental.pallas import tpu as pltpu


def _inception_kernel(
    x_ref,                 # (1, Cin, H*W)           channel-major, lane-dense
    row_ref, col_ref,      # (1, H*W) int32          spatial row / col index per lane
    wf_ref, bf_ref,        # (ch1+crp2+crp3, Cin), (ch1+crp2+crp3, 1)   fused 1x1
    w3_ref, b3_ref,        # (ch3, 9*crp2),  (ch3, 1)                   3x3 im2col
    w5_ref, b5_ref,        # (ch5, 25*crp3), (ch5, 1)                   5x5 im2col
    w4_ref, b4_ref,        # (pool_proj, Cin), (pool_proj, 1)           pool proj
    o_ref,                 # (1, Ctot, H*W)          fused, lane-dense output
    patches2, patches3,    # VMEM scratch: (9*crp2, H*W), (25*crp3, H*W)
    *, H, W, ch1, crp2, crp3,
):
    HW = H * W
    x = x_ref[0]                       # (Cin, HW)
    row = row_ref[...]                 # (1, HW) int32
    col = col_ref[...]                 # (1, HW) int32

    def shift_mask(t, dy, dx, pad, fill):
        # patch[:, i] = t[:, i + off] if the source spatial position is inside
        # the image, else `fill`.  Pure lane rotate + VPU select (no copies).
        off = (dy - pad) * W + (dx - pad)
        shift = (-off) % HW
        v = pltpu.roll(t, shift, axis=1) if shift else t
        conds = []
        if dy < pad:
            conds.append(row >= (pad - dy))
        if dy > pad:
            conds.append(row < H - (dy - pad))
        if dx < pad:
            conds.append(col >= (pad - dx))
        if dx > pad:
            conds.append(col < W - (dx - pad))
        if conds:
            m = conds[0]
            for c in conds[1:]:
                m = jnp.logical_and(m, c)
            v = jnp.where(m, v, fill)
        return v

    def relu_mm(w, act, b):
        # (Cout, K) @ (K, HW) + (Cout, 1)  -> (Cout, HW), all lane-dense.
        y = jnp.dot(w, act, preferred_element_type=jnp.float32) + b
        return jnp.maximum(y, 0.0)

    ch3 = w3_ref.shape[0]
    ch5 = w5_ref.shape[0]
    chp = w4_ref.shape[0]

    # ---- fused 1x1 GEMM: branch-1 conv + 3x3-reduce + 5x5-reduce ------------
    y0 = relu_mm(wf_ref[...], x, bf_ref[...])        # (ch1+crp2+crp3, HW)
    o_ref[0, 0:ch1, :] = y0[0:ch1, :].astype(o_ref.dtype)
    t2 = y0[ch1:ch1 + crp2, :]                       # (crp2, HW), pad rows are 0
    t3 = y0[ch1 + crp2:ch1 + crp2 + crp3, :]         # (crp3, HW), pad rows are 0

    # ---- branch 2: 3x3 conv (pad 1) via shift+mask im2col -------------------
    for k in range(9):
        dy, dx = divmod(k, 3)
        patches2[k * crp2:(k + 1) * crp2, :] = shift_mask(t2, dy, dx, 1, 0.0)
    o_ref[0, ch1:ch1 + ch3, :] = relu_mm(
        w3_ref[...], patches2[...], b3_ref[...]).astype(o_ref.dtype)

    # ---- branch 3: 5x5 conv (pad 2) via shift+mask im2col -------------------
    for k in range(25):
        dy, dx = divmod(k, 5)
        patches3[k * crp3:(k + 1) * crp3, :] = shift_mask(t3, dy, dx, 2, 0.0)
    c23 = ch1 + ch3
    o_ref[0, c23:c23 + ch5, :] = relu_mm(
        w5_ref[...], patches3[...], b5_ref[...]).astype(o_ref.dtype)

    # ---- branch 4: separable 3x3 maxpool (-inf pad) -> 1x1 proj -------------
    rmax = jnp.maximum(jnp.maximum(shift_mask(x, 0, 1, 1, -jnp.inf), x),
                       shift_mask(x, 2, 1, 1, -jnp.inf))
    cmax = jnp.maximum(jnp.maximum(shift_mask(rmax, 1, 0, 1, -jnp.inf), rmax),
                       shift_mask(rmax, 1, 2, 1, -jnp.inf))
    c234 = c23 + ch5
    o_ref[0, c234:c234 + chp, :] = relu_mm(
        w4_ref[...], cmax, b4_ref[...]).astype(o_ref.dtype)


def inception_forward(x_nchw, params):
    """x_nchw: (N, Cin, H, W) float32.  Returns (N, Ctot, H, W), matching PyTorch."""
    N, Cin, H, W = x_nchw.shape
    HW = H * W
    # NCHW is already channel-major: flattening the spatial dims is free.
    x_cf = x_nchw.reshape(N, Cin, HW).astype(jnp.float32)

    (w1, b1, wr2, br2, w3, b3, wr3, br3, w5, b5, w4, b4) = params
    ch1 = w1.shape[1]
    cr2 = wr2.shape[1]
    ch3 = w3.shape[-1]
    cr3 = wr3.shape[1]
    ch5 = w5.shape[-1]
    chp = w4.shape[1]
    ctot = ch1 + ch3 + ch5 + chp

    # Round the reduce-channel counts up to 8 sublanes so every t2/t3 slice and
    # every im2col patch-block store is (8,128)-tile aligned.
    crp2 = -(-cr2 // 8) * 8
    crp3 = -(-cr3 // 8) * 8

    def pad_rows(a, n):
        return jnp.pad(a, ((0, n - a.shape[0]), (0, 0)))

    # Fused 1x1 weight: [branch1 ; 3x3-reduce (zero-padded) ; 5x5-reduce (zero-padded)].
    wf = jnp.concatenate(
        [w1.T, pad_rows(wr2.T, crp2), pad_rows(wr3.T, crp3)], axis=0)
    bf = jnp.concatenate(
        [b1.reshape(ch1, 1), pad_rows(br2.reshape(cr2, 1), crp2),
         pad_rows(br3.reshape(cr3, 1), crp3)], axis=0)

    # Conv kernels flattened to im2col layout (zero columns for the padded rows).
    w3m = (jnp.zeros((3, 3, crp2, ch3), jnp.float32)
           .at[:, :, :cr2, :].set(w3).reshape(9 * crp2, ch3).T)
    w5m = (jnp.zeros((5, 5, crp3, ch5), jnp.float32)
           .at[:, :, :cr3, :].set(w5).reshape(25 * crp3, ch5).T)

    # Spatial row/col index per lane (avoids vector int div/mod in-kernel).
    idx = jnp.arange(HW, dtype=jnp.int32)
    row_ids = (idx // W).reshape(1, HW)
    col_ids = (idx % W).reshape(1, HW)

    aux = (row_ids, col_ids,
           wf, bf, w3m, b3.reshape(ch3, 1), w5m, b5.reshape(ch5, 1),
           w4.T, b4.reshape(chp, 1))

    def full_spec(a):
        nd = a.ndim
        return pl.BlockSpec(a.shape, lambda n, _nd=nd: (0,) * _nd)

    in_specs = [pl.BlockSpec((1, Cin, HW), lambda n: (n, 0, 0))]
    in_specs += [full_spec(a) for a in aux]

    grid_spec = pltpu.PrefetchScalarGridSpec(
        num_scalar_prefetch=0,
        grid=(N,),
        in_specs=in_specs,
        out_specs=pl.BlockSpec((1, ctot, HW), lambda n: (n, 0, 0)),
        scratch_shapes=[
            pltpu.VMEM((9 * crp2, HW), jnp.float32),    # im2col, 3x3 (tile-aligned blocks)
            pltpu.VMEM((25 * crp3, HW), jnp.float32),   # im2col, 5x5 (tile-aligned blocks)
        ],
    )

    out = pl.pallas_call(
        functools.partial(_inception_kernel, H=H, W=W,
                          ch1=ch1, crp2=crp2, crp3=crp3),
        out_shape=jax.ShapeDtypeStruct((N, ctot, HW), jnp.float32),
        grid_spec=grid_spec,
        compiler_params=pltpu.CompilerParams(
            dimension_semantics=("parallel",)),
    )(x_cf, *aux)

    # Already channel-major: NCHW result is a free reshape (no transpose/concat).
    return out.reshape(N, ctot, H, W)


def make_params(key, in_channels, ch1x1, ch3x3red, ch3x3, ch5x5red, ch5x5, pool_proj):
    """Deterministic synthetic weights (matmul layout: (Cin, Cout); conv HWIO)."""
    ks = jax.random.split(key, 12)
    s = 0.1
    w1 = s * jax.random.normal(ks[0], (in_channels, ch1x1), jnp.float32)
    b1 = s * jax.random.normal(ks[1], (1, ch1x1), jnp.float32)
    wr2 = s * jax.random.normal(ks[2], (in_channels, ch3x3red), jnp.float32)
    br2 = s * jax.random.normal(ks[3], (1, ch3x3red), jnp.float32)
    w3 = s * jax.random.normal(ks[4], (3, 3, ch3x3red, ch3x3), jnp.float32)
    b3 = s * jax.random.normal(ks[5], (1, ch3x3), jnp.float32)
    wr3 = s * jax.random.normal(ks[6], (in_channels, ch5x5red), jnp.float32)
    br3 = s * jax.random.normal(ks[7], (1, ch5x5red), jnp.float32)
    w5 = s * jax.random.normal(ks[8], (5, 5, ch5x5red, ch5x5), jnp.float32)
    b5 = s * jax.random.normal(ks[9], (1, ch5x5), jnp.float32)
    w4 = s * jax.random.normal(ks[10], (in_channels, pool_proj), jnp.float32)
    b4 = s * jax.random.normal(ks[11], (1, pool_proj), jnp.float32)
    return (w1, b1, wr2, br2, w3, b3, wr3, br3, w5, b5, w4, b4)


# ---------------- pure-JAX reference (for correctness check) ----------------
def _ref_conv(x, w_hwio, b, pad):
    y = lax.conv_general_dilated(
        x, w_hwio, window_strides=(1, 1), padding=[(pad, pad), (pad, pad)],
        dimension_numbers=("NHWC", "HWIO", "NHWC"))
    return jnp.maximum(y + b.reshape(1, 1, 1, -1), 0.0)


def inception_reference(x_nchw, params):
    (w1, b1, wr2, br2, w3, b3, wr3, br3, w5, b5, w4, b4) = params
    x = jnp.transpose(x_nchw, (0, 2, 3, 1)).astype(jnp.float32)
    cin = x.shape[-1]
    y1 = _ref_conv(x, w1.reshape(1, 1, cin, -1), b1, 0)
    t2 = _ref_conv(x, wr2.reshape(1, 1, cin, -1), br2, 0)
    y2 = _ref_conv(t2, w3, b3, 1)
    t3 = _ref_conv(x, wr3.reshape(1, 1, cin, -1), br3, 0)
    y3 = _ref_conv(t3, w5, b5, 2)
    mp = lax.reduce_window(x, -jnp.inf, lax.max, (1, 3, 3, 1), (1, 1, 1, 1),
                           [(0, 0), (1, 1), (1, 1), (0, 0)])
    y4 = _ref_conv(mp, w4.reshape(1, 1, cin, -1), b4, 0)
    out = jnp.concatenate([y1, y2, y3, y4], axis=-1)
    return jnp.transpose(out, (0, 3, 1, 2))


if __name__ == "__main__":
    key = jax.random.PRNGKey(0)
    kx, kp = jax.random.split(key)

    # Small shapes consistent with Inception(in_channels=4, 8, 4, 8, 4, 8, 8)
    N, Cin, H, W = 2, 4, 16, 16
    ch1x1, ch3x3red, ch3x3, ch5x5red, ch5x5, pool_proj = 8, 4, 8, 4, 8, 8

    x = jax.random.normal(kx, (N, Cin, H, W), jnp.float32)
    params = make_params(kp, Cin, ch1x1, ch3x3red, ch3x3, ch5x5red, ch5x5, pool_proj)

    out = jax.block_until_ready(inception_forward(x, params))
    ref = jax.block_until_ready(inception_reference(x, params))

    assert out.shape == (N, ch1x1 + ch3x3 + ch5x5 + pool_proj, H, W), out.shape
    np.testing.assert_allclose(np.asarray(out), np.asarray(ref), rtol=1e-4, atol=1e-4)

    print("KERNEL_OK")
</pallas_src>

<mosaic_0001>
module attributes {stable_mosaic.version = 11 : i64} {
  func.func @_inception_kernel(%arg0: i32, %arg1: memref<1x4x256xf32, #tpu.memory_space<vmem>>, %arg2: memref<1x256xi32, #tpu.memory_space<vmem>>, %arg3: memref<1x256xi32, #tpu.memory_space<vmem>>, %arg4: memref<24x4xf32, #tpu.memory_space<vmem>>, %arg5: memref<24x1xf32, #tpu.memory_space<vmem>>, %arg6: memref<8x72xf32, #tpu.memory_space<vmem>>, %arg7: memref<8x1xf32, #tpu.memory_space<vmem>>, %arg8: memref<8x200xf32, #tpu.memory_space<vmem>>, %arg9: memref<8x1xf32, #tpu.memory_space<vmem>>, %arg10: memref<8x4xf32, #tpu.memory_space<vmem>>, %arg11: memref<8x1xf32, #tpu.memory_space<vmem>>, %arg12: memref<1x32x256xf32, #tpu.memory_space<vmem>>, %arg13: memref<72x256xf32, #tpu.memory_space<vmem>>, %arg14: memref<200x256xf32, #tpu.memory_space<vmem>>) attributes {dimension_semantics = [#tpu.dimension_semantics<parallel>], iteration_bounds = array<i64: 2>, scalar_prefetch = 0 : i64, scratch_operands = 2 : i64, tpu.core_type = #tpu.core_type<tc>, window_params = [{transform_indices = @transform_0, window_bounds = array<i64: 1, 4, 256>}, {pipeline_mode = #tpu.pipeline_mode<synchronous>, transform_indices = @transform_1, window_bounds = array<i64: 1, 256>}, {pipeline_mode = #tpu.pipeline_mode<synchronous>, transform_indices = @transform_2, window_bounds = array<i64: 1, 256>}, {pipeline_mode = #tpu.pipeline_mode<synchronous>, transform_indices = @transform_3, window_bounds = array<i64: 24, 4>}, {pipeline_mode = #tpu.pipeline_mode<synchronous>, transform_indices = @transform_4, window_bounds = array<i64: 24, 1>}, {pipeline_mode = #tpu.pipeline_mode<synchronous>, transform_indices = @transform_5, window_bounds = array<i64: 8, 72>}, {pipeline_mode = #tpu.pipeline_mode<synchronous>, transform_indices = @transform_6, window_bounds = array<i64: 8, 1>}, {pipeline_mode = #tpu.pipeline_mode<synchronous>, transform_indices = @transform_7, window_bounds = array<i64: 8, 200>}, {pipeline_mode = #tpu.pipeline_mode<synchronous>, transform_indices = @transform_8, window_bounds = array<i64: 8, 1>}, {pipeline_mode = #tpu.pipeline_mode<synchronous>, transform_indices = @transform_9, window_bounds = array<i64: 8, 4>}, {pipeline_mode = #tpu.pipeline_mode<synchronous>, transform_indices = @transform_10, window_bounds = array<i64: 8, 1>}, {transform_indices = @transform_11, window_bounds = array<i64: 1, 32, 256>}]} {
    %c0 = arith.constant 0 : index
    %c0_0 = arith.constant 0 : index
    %c0_1 = arith.constant 0 : index
    %0 = vector.load %arg1[%c0, %c0_0, %c0_1] : memref<1x4x256xf32, #tpu.memory_space<vmem>>, vector<1x4x256xf32>
    %1 = vector.shape_cast %0 : vector<1x4x256xf32> to vector<4x256xf32>
    %c0_2 = arith.constant 0 : index
    %c0_3 = arith.constant 0 : index
    %2 = vector.load %arg2[%c0_2, %c0_3] : memref<1x256xi32, #tpu.memory_space<vmem>>, vector<1x256xi32>
    %c0_4 = arith.constant 0 : index
    %c0_5 = arith.constant 0 : index
    %3 = vector.load %arg3[%c0_4, %c0_5] : memref<1x256xi32, #tpu.memory_space<vmem>>, vector<1x256xi32>
    %c0_6 = arith.constant 0 : index
    %c0_7 = arith.constant 0 : index
    %4 = vector.load %arg4[%c0_6, %c0_7] : memref<24x4xf32, #tpu.memory_space<vmem>>, vector<24x4xf32>
    %c0_8 = arith.constant 0 : index
    %c0_9 = arith.constant 0 : index
    %5 = vector.load %arg5[%c0_8, %c0_9] : memref<24x1xf32, #tpu.memory_space<vmem>>, vector<24x1xf32>
    %cst = arith.constant dense<0.000000e+00> : vector<24x256xf32>
    %6 = tpu.matmul %4, %1, %cst {dimension_numbers = #tpu.dot_dimension_numbers<[1], [0], [0], [1], [0, 0, 1, 1], [], []>} : vector<24x4xf32>, vector<4x256xf32>, vector<24x256xf32> -> vector<24x256xf32>
    %7 = vector.broadcast %5 : vector<24x1xf32> to vector<24x256xf32>
    %8 = arith.addf %6, %7 : vector<24x256xf32>
    %cst_10 = arith.constant 0.000000e+00 : f32
    %9 = vector.broadcast %cst_10 : f32 to vector<24x256xf32>
    %10 = arith.maximumf %8, %9 : vector<24x256xf32>
    %11 = vector.extract_strided_slice %10 {offsets = [0, 0], sizes = [8, 256], strides = [1, 1]} : vector<24x256xf32> to vector<8x256xf32>
    %c0_11 = arith.constant 0 : index
    %c0_12 = arith.constant 0 : index
    %c0_13 = arith.constant 0 : index
    %12 = vector.load %arg12[%c0_11, %c0_12, %c0_13] : memref<1x32x256xf32, #tpu.memory_space<vmem>>, vector<1x8x256xf32>
    %13 = vector.shape_cast %12 : vector<1x8x256xf32> to vector<8x256xf32>
    %14 = vector.shape_cast %11 : vector<8x256xf32> to vector<1x8x256xf32>
    tpu.vector_store %arg12[%c0_11, %c0_12, %c0_13], %14 {strides = array<i32>} : memref<1x32x256xf32, #tpu.memory_space<vmem>>, vector<1x8x256xf32>,
    %15 = vector.extract_strided_slice %10 {offsets = [8, 0], sizes = [8, 256], strides = [1, 1]} : vector<24x256xf32> to vector<8x256xf32>
    %16 = vector.extract_strided_slice %10 {offsets = [16, 0], sizes = [8, 256], strides = [1, 1]} : vector<24x256xf32> to vector<8x256xf32>
    %c17_i32 = arith.constant 17 : i32
    %17 = tpu.dynamic_rotate %15 by %c17_i32 dim 1 : vector<8x256xf32>, i32 -> vector<8x256xf32>
    %c1_i32 = arith.constant 1 : i32
    %18 = vector.broadcast %c1_i32 : i32 to vector<1x256xi32>
    %19 = arith.cmpi sge, %2, %18 : vector<1x256xi32>
    %c1_i32_14 = arith.constant 1 : i32
    %20 = vector.broadcast %c1_i32_14 : i32 to vector<1x256xi32>
    %21 = arith.cmpi sge, %3, %20 : vector<1x256xi32>
    %22 = arith.andi %19, %21 : vector<1x256xi1>
    %cst_15 = arith.constant 0.000000e+00 : f32
    %23 = vector.shape_cast %22 : vector<1x256xi1> to vector<1x256xi1>
    %24 = vector.broadcast %23 : vector<1x256xi1> to vector<8x256xi1>
    %25 = vector.broadcast %cst_15 : f32 to vector<8x256xf32>
    %26 = arith.select %24, %17, %25 : vector<8x256xi1>, vector<8x256xf32>
    %c0_16 = arith.constant 0 : index
    %c0_17 = arith.constant 0 : index
    %27 = vector.load %arg13[%c0_16, %c0_17] : memref<72x256xf32, #tpu.memory_space<vmem>>, vector<8x256xf32>
    tpu.vector_store %arg13[%c0_16, %c0_17], %26 {strides = array<i32>} : memref<72x256xf32, #tpu.memory_space<vmem>>, vector<8x256xf32>,
    %c16_i32 = arith.constant 16 : i32
    %28 = tpu.dynamic_rotate %15 by %c16_i32 dim 1 : vector<8x256xf32>, i32 -> vector<8x256xf32>
    %c1_i32_18 = arith.constant 1 : i32
    %29 = vector.broadcast %c1_i32_18 : i32 to vector<1x256xi32>
    %30 = arith.cmpi sge, %2, %29 : vector<1x256xi32>
    %cst_19 = arith.constant 0.000000e+00 : f32
    %31 = vector.shape_cast %30 : vector<1x256xi1> to vector<1x256xi1>
    %32 = vector.broadcast %31 : vector<1x256xi1> to vector<8x256xi1>
    %33 = vector.broadcast %cst_19 : f32 to vector<8x256xf32>
    %34 = arith.select %32, %28, %33 : vector<8x256xi1>, vector<8x256xf32>
    %c8 = arith.constant 8 : index
    %c0_20 = arith.constant 0 : index
    %35 = vector.load %arg13[%c8, %c0_20] : memref<72x256xf32, #tpu.memory_space<vmem>>, vector<8x256xf32>
    tpu.vector_store %arg13[%c8, %c0_20], %34 {strides = array<i32>} : memref<72x256xf32, #tpu.memory_space<vmem>>, vector<8x256xf32>,
    %c15_i32 = arith.constant 15 : i32
    %36 = tpu.dynamic_rotate %15 by %c15_i32 dim 1 : vector<8x256xf32>, i32 -> vector<8x256xf32>
    %c1_i32_21 = arith.constant 1 : i32
    %37 = vector.broadcast %c1_i32_21 : i32 to vector<1x256xi32>
    %38 = arith.cmpi sge, %2, %37 : vector<1x256xi32>
    %c15_i32_22 = arith.constant 15 : i32
    %39 = vector.broadcast %c15_i32_22 : i32 to vector<1x256xi32>
    %40 = arith.cmpi slt, %3, %39 : vector<1x256xi32>
    %41 = arith.andi %38, %40 : vector<1x256xi1>
    %cst_23 = arith.constant 0.000000e+00 : f32
    %42 = vector.shape_cast %41 : vector<1x256xi1> to vector<1x256xi1>
    %43 = vector.broadcast %42 : vector<1x256xi1> to vector<8x256xi1>
    %44 = vector.broadcast %cst_23 : f32 to vector<8x256xf32>
    %45 = arith.select %43, %36, %44 : vector<8x256xi1>, vector<8x256xf32>
    %c16 = arith.constant 16 : index
    %c0_24 = arith.constant 0 : index
    %46 = vector.load %arg13[%c16, %c0_24] : memref<72x256xf32, #tpu.memory_space<vmem>>, vector<8x256xf32>
    tpu.vector_store %arg13[%c16, %c0_24], %45 {strides = array<i32>} : memref<72x256xf32, #tpu.memory_space<vmem>>, vector<8x256xf32>,
    %c1_i32_25 = arith.constant 1 : i32
    %47 = tpu.dynamic_rotate %15 by %c1_i32_25 dim 1 : vector<8x256xf32>, i32 -> vector<8x256xf32>
    %c1_i32_26 = arith.constant 1 : i32
    %48 = vector.broadcast %c1_i32_26 : i32 to vector<1x256xi32>
    %49 = arith.cmpi sge, %3, %48 : vector<1x256xi32>
    %cst_27 = arith.constant 0.000000e+00 : f32
    %50 = vector.shape_cast %49 : vector<1x256xi1> to vector<1x256xi1>
    %51 = vector.broadcast %50 : vector<1x256xi1> to vector<8x256xi1>
    %52 = vector.broadcast %cst_27 : f32 to vector<8x256xf32>
    %53 = arith.select %51, %47, %52 : vector<8x256xi1>, vector<8x256xf32>
    %c24 = arith.constant 24 : index
    %c0_28 = arith.constant 0 : index
    %54 = vector.load %arg13[%c24, %c0_28] : memref<72x256xf32, #tpu.memory_space<vmem>>, vector<8x256xf32>
    tpu.vector_store %arg13[%c24, %c0_28], %53 {strides = array<i32>} : memref<72x256xf32, #tpu.memory_space<vmem>>, vector<8x256xf32>,
    %c32 = arith.constant 32 : index
    %c0_29 = arith.constant 0 : index
    %55 = vector.load %arg13[%c32, %c0_29] : memref<72x256xf32, #tpu.memory_space<vmem>>, vector<8x256xf32>
    tpu.vector_store %arg13[%c32, %c0_29], %15 {strides = array<i32>} : memref<72x256xf32, #tpu.memory_space<vmem>>, vector<8x256xf32>,
    %c255_i32 = arith.constant 255 : i32
    %56 = tpu.dynamic_rotate %15 by %c255_i32 dim 1 : vector<8x256xf32>, i32 -> vector<8x256xf32>
    %c15_i32_30 = arith.constant 15 : i32
    %57 = vector.broadcast %c15_i32_30 : i32 to vector<1x256xi32>
    %58 = arith.cmpi slt, %3, %57 : vector<1x256xi32>
    %cst_31 = arith.constant 0.000000e+00 : f32
    %59 = vector.shape_cast %58 : vector<1x256xi1> to vector<1x256xi1>
    %60 = vector.broadcast %59 : vector<1x256xi1> to vector<8x256xi1>
    %61 = vector.broadcast %cst_31 : f32 to vector<8x256xf32>
    %62 = arith.select %60, %56, %61 : vector<8x256xi1>, vector<8x256xf32>
    %c40 = arith.constant 40 : index
    %c0_32 = arith.constant 0 : index
    %63 = vector.load %arg13[%c40, %c0_32] : memref<72x256xf32, #tpu.memory_space<vmem>>, vector<8x256xf32>
    tpu.vector_store %arg13[%c40, %c0_32], %62 {strides = array<i32>} : memref<72x256xf32, #tpu.memory_space<vmem>>, vector<8x256xf32>,
    %c241_i32 = arith.constant 241 : i32
    %64 = tpu.dynamic_rotate %15 by %c241_i32 dim 1 : vector<8x256xf32>, i32 -> vector<8x256xf32>
    %c15_i32_33 = arith.constant 15 : i32
    %65 = vector.broadcast %c15_i32_33 : i32 to vector<1x256xi32>
    %66 = arith.cmpi slt, %2, %65 : vector<1x256xi32>
    %c1_i32_34 = arith.constant 1 : i32
    %67 = vector.broadcast %c1_i32_34 : i32 to vector<1x256xi32>
    %68 = arith.cmpi sge, %3, %67 : vector<1x256xi32>
    %69 = arith.andi %66, %68 : vector<1x256xi1>
    %cst_35 = arith.constant 0.000000e+00 : f32
    %70 = vector.shape_cast %69 : vector<1x256xi1> to vector<1x256xi1>
    %71 = vector.broadcast %70 : vector<1x256xi1> to vector<8x256xi1>
    %72 = vector.broadcast %cst_35 : f32 to vector<8x256xf32>
    %73 = arith.select %71, %64, %72 : vector<8x256xi1>, vector<8x256xf32>
    %c48 = arith.constant 48 : index
    %c0_36 = arith.constant 0 : index
    %74 = vector.load %arg13[%c48, %c0_36] : memref<72x256xf32, #tpu.memory_space<vmem>>, vector<8x256xf32>
    tpu.vector_store %arg13[%c48, %c0_36], %73 {strides = array<i32>} : memref<72x256xf32, #tpu.memory_space<vmem>>, vector<8x256xf32>,
    %c240_i32 = arith.constant 240 : i32
    %75 = tpu.dynamic_rotate %15 by %c240_i32 dim 1 : vector<8x256xf32>, i32 -> vector<8x256xf32>
    %c15_i32_37 = arith.constant 15 : i32
    %76 = vector.broadcast %c15_i32_37 : i32 to vector<1x256xi32>
    %77 = arith.cmpi slt, %2, %76 : vector<1x256xi32>
    %cst_38 = arith.constant 0.000000e+00 : f32
    %78 = vector.shape_cast %77 : vector<1x256xi1> to vector<1x256xi1>
    %79 = vector.broadcast %78 : vector<1x256xi1> to vector<8x256xi1>
    %80 = vector.broadcast %cst_38 : f32 to vector<8x256xf32>
    %81 = arith.select %79, %75, %80 : vector<8x256xi1>, vector<8x256xf32>
    %c56 = arith.constant 56 : index
    %c0_39 = arith.constant 0 : index
    %82 = vector.load %arg13[%c56, %c0_39] : memref<72x256xf32, #tpu.memory_space<vmem>>, vector<8x256xf32>
    tpu.vector_store %arg13[%c56, %c0_39], %81 {strides = array<i32>} : memref<72x256xf32, #tpu.memory_space<vmem>>, vector<8x256xf32>,
    %c239_i32 = arith.constant 239 : i32
    %83 = tpu.dynamic_rotate %15 by %c239_i32 dim 1 : vector<8x256xf32>, i32 -> vector<8x256xf32>
    %c15_i32_40 = arith.constant 15 : i32
    %84 = vector.broadcast %c15_i32_40 : i32 to vector<1x256xi32>
    %85 = arith.cmpi slt, %2, %84 : vector<1x256xi32>
    %c15_i32_41 = arith.constant 15 : i32
    %86 = vector.broadcast %c15_i32_41 : i32 to vector<1x256xi32>
    %87 = arith.cmpi slt, %3, %86 : vector<1x256xi32>
    %88 = arith.andi %85, %87 : vector<1x256xi1>
    %cst_42 = arith.constant 0.000000e+00 : f32
    %89 = vector.shape_cast %88 : vector<1x256xi1> to vector<1x256xi1>
    %90 = vector.broadcast %89 : vector<1x256xi1> to vector<8x256xi1>
    %91 = vector.broadcast %cst_42 : f32 to vector<8x256xf32>
    %92 = arith.select %90, %83, %91 : vector<8x256xi1>, vector<8x256xf32>
    %c64 = arith.constant 64 : index
    %c0_43 = arith.constant 0 : index
    %93 = vector.load %arg13[%c64, %c0_43] : memref<72x256xf32, #tpu.memory_space<vmem>>, vector<8x256xf32>
    tpu.vector_store %arg13[%c64, %c0_43], %92 {strides = array<i32>} : memref<72x256xf32, #tpu.memory_space<vmem>>, vector<8x256xf32>,
    %c0_44 = arith.constant 0 : index
    %c0_45 = arith.constant 0 : index
    %94 = vector.load %arg6[%c0_44, %c0_45] : memref<8x72xf32, #tpu.memory_space<vmem>>, vector<8x72xf32>
    %c0_46 = arith.constant 0 : index
    %c0_47 = arith.constant 0 : index
    %95 = vector.load %arg13[%c0_46, %c0_47] : memref<72x256xf32, #tpu.memory_space<vmem>>, vector<72x256xf32>
    %c0_48 = arith.constant 0 : index
    %c0_49 = arith.constant 0 : index
    %96 = vector.load %arg7[%c0_48, %c0_49] : memref<8x1xf32, #tpu.memory_space<vmem>>, vector<8x1xf32>
    %cst_50 = arith.constant dense<0.000000e+00> : vector<8x256xf32>
    %97 = tpu.matmul %94, %95, %cst_50 {dimension_numbers = #tpu.dot_dimension_numbers<[1], [0], [0], [1], [0, 0, 1, 1], [], []>} : vector<8x72xf32>, vector<72x256xf32>, vector<8x256xf32> -> vector<8x256xf32>
    %98 = vector.broadcast %96 : vector<8x1xf32> to vector<8x256xf32>
    %99 = arith.addf %97, %98 : vector<8x256xf32>
    %cst_51 = arith.constant 0.000000e+00 : f32
    %100 = vector.broadcast %cst_51 : f32 to vector<8x256xf32>
    %101 = arith.maximumf %99, %100 : vector<8x256xf32>
    %c0_52 = arith.constant 0 : index
    %c8_53 = arith.constant 8 : index
    %c0_54 = arith.constant 0 : index
    %102 = vector.load %arg12[%c0_52, %c8_53, %c0_54] : memref<1x32x256xf32, #tpu.memory_space<vmem>>, vector<1x8x256xf32>
    %103 = vector.shape_cast %102 : vector<1x8x256xf32> to vector<8x256xf32>
    %104 = vector.shape_cast %101 : vector<8x256xf32> to vector<1x8x256xf32>
    tpu.vector_store %arg12[%c0_52, %c8_53, %c0_54], %104 {strides = array<i32>} : memref<1x32x256xf32, #tpu.memory_space<vmem>>, vector<1x8x256xf32>,
    %c34_i32 = arith.constant 34 : i32
    %105 = tpu.dynamic_rotate %16 by %c34_i32 dim 1 : vector<8x256xf32>, i32 -> vector<8x256xf32>
    %c2_i32 = arith.constant 2 : i32
    %106 = vector.broadcast %c2_i32 : i32 to vector<1x256xi32>
    %107 = arith.cmpi sge, %2, %106 : vector<1x256xi32>
    %c2_i32_55 = arith.constant 2 : i32
    %108 = vector.broadcast %c2_i32_55 : i32 to vector<1x256xi32>
    %109 = arith.cmpi sge, %3, %108 : vector<1x256xi32>
    %110 = arith.andi %107, %109 : vector<1x256xi1>
    %cst_56 = arith.constant 0.000000e+00 : f32
    %111 = vector.shape_cast %110 : vector<1x256xi1> to vector<1x256xi1>
    %112 = vector.broadcast %111 : vector<1x256xi1> to vector<8x256xi1>
    %113 = vector.broadcast %cst_56 : f32 to vector<8x256xf32>
    %114 = arith.select %112, %105, %113 : vector<8x256xi1>, vector<8x256xf32>
    %c0_57 = arith.constant 0 : index
    %c0_58 = arith.constant 0 : index
    %115 = vector.load %arg14[%c0_57, %c0_58] : memref<200x256xf32, #tpu.memory_space<vmem>>, vector<8x256xf32>
    tpu.vector_store %arg14[%c0_57, %c0_58], %114 {strides = array<i32>} : memref<200x256xf32, #tpu.memory_space<vmem>>, vector<8x256xf32>,
    %c33_i32 = arith.constant 33 : i32
    %116 = tpu.dynamic_rotate %16 by %c33_i32 dim 1 : vector<8x256xf32>, i32 -> vector<8x256xf32>
    %c2_i32_59 = arith.constant 2 : i32
    %117 = vector.broadcast %c2_i32_59 : i32 to vector<1x256xi32>
    %118 = arith.cmpi sge, %2, %117 : vector<1x256xi32>
    %c1_i32_60 = arith.constant 1 : i32
    %119 = vector.broadcast %c1_i32_60 : i32 to vector<1x256xi32>
    %120 = arith.cmpi sge, %3, %119 : vector<1x256xi32>
    %121 = arith.andi %118, %120 : vector<1x256xi1>
    %cst_61 = arith.constant 0.000000e+00 : f32
    %122 = vector.shape_cast %121 : vector<1x256xi1> to vector<1x256xi1>
    %123 = vector.broadcast %122 : vector<1x256xi1> to vector<8x256xi1>
    %124 = vector.broadcast %cst_61 : f32 to vector<8x256xf32>
    %125 = arith.select %123, %116, %124 : vector<8x256xi1>, vector<8x256xf32>
    %c8_62 = arith.constant 8 : index
    %c0_63 = arith.constant 0 : index
    %126 = vector.load %arg14[%c8_62, %c0_63] : memref<200x256xf32, #tpu.memory_space<vmem>>, vector<8x256xf32>
    tpu.vector_store %arg14[%c8_62, %c0_63], %125 {strides = array<i32>} : memref<200x256xf32, #tpu.memory_space<vmem>>, vector<8x256xf32>,
    %c32_i32 = arith.constant 32 : i32
    %127 = tpu.dynamic_rotate %16 by %c32_i32 dim 1 : vector<8x256xf32>, i32 -> vector<8x256xf32>
    %c2_i32_64 = arith.constant 2 : i32
    %128 = vector.broadcast %c2_i32_64 : i32 to vector<1x256xi32>
    %129 = arith.cmpi sge, %2, %128 : vector<1x256xi32>
    %cst_65 = arith.constant 0.000000e+00 : f32
    %130 = vector.shape_cast %129 : vector<1x256xi1> to vector<1x256xi1>
    %131 = vector.broadcast %130 : vector<1x256xi1> to vector<8x256xi1>
    %132 = vector.broadcast %cst_65 : f32 to vector<8x256xf32>
    %133 = arith.select %131, %127, %132 : vector<8x256xi1>, vector<8x256xf32>
    %c16_66 = arith.constant 16 : index
    %c0_67 = arith.constant 0 : index
    %134 = vector.load %arg14[%c16_66, %c0_67] : memref<200x256xf32, #tpu.memory_space<vmem>>, vector<8x256xf32>
    tpu.vector_store %arg14[%c16_66, %c0_67], %133 {strides = array<i32>} : memref<200x256xf32, #tpu.memory_space<vmem>>, vector<8x256xf32>,
    %c31_i32 = arith.constant 31 : i32
    %135 = tpu.dynamic_rotate %16 by %c31_i32 dim 1 : vector<8x256xf32>, i32 -> vector<8x256xf32>
    %c2_i32_68 = arith.constant 2 : i32
    %136 = vector.broadcast %c2_i32_68 : i32 to vector<1x256xi32>
    %137 = arith.cmpi sge, %2, %136 : vector<1x256xi32>
    %c15_i32_69 = arith.constant 15 : i32
    %138 = vector.broadcast %c15_i32_69 : i32 to vector<1x256xi32>
    %139 = arith.cmpi slt, %3, %138 : vector<1x256xi32>
    %140 = arith.andi %137, %139 : vector<1x256xi1>
    %cst_70 = arith.constant 0.000000e+00 : f32
    %141 = vector.shape_cast %140 : vector<1x256xi1> to vector<1x256xi1>
    %142 = vector.broadcast %141 : vector<1x256xi1> to vector<8x256xi1>
    %143 = vector.broadcast %cst_70 : f32 to vector<8x256xf32>
    %144 = arith.select %142, %135, %143 : vector<8x256xi1>, vector<8x256xf32>
    %c24_71 = arith.constant 24 : index
    %c0_72 = arith.constant 0 : index
    %145 = vector.load %arg14[%c24_71, %c0_72] : memref<200x256xf32, #tpu.memory_space<vmem>>, vector<8x256xf32>
    tpu.vector_store %arg14[%c24_71, %c0_72], %144 {strides = array<i32>} : memref<200x256xf32, #tpu.memory_space<vmem>>, vector<8x256xf32>,
    %c30_i32 = arith.constant 30 : i32
    %146 = tpu.dynamic_rotate %16 by %c30_i32 dim 1 : vector<8x256xf32>, i32 -> vector<8x256xf32>
    %c2_i32_73 = arith.constant 2 : i32
    %147 = vector.broadcast %c2_i32_73 : i32 to vector<1x256xi32>
    %148 = arith.cmpi sge, %2, %147 : vector<1x256xi32>
    %c14_i32 = arith.constant 14 : i32
    %149 = vector.broadcast %c14_i32 : i32 to vector<1x256xi32>
    %150 = arith.cmpi slt, %3, %149 : vector<1x256xi32>
    %151 = arith.andi %148, %150 : vector<1x256xi1>
    %cst_74 = arith.constant 0.000000e+00 : f32
    %152 = vector.shape_cast %151 : vector<1x256xi1> to vector<1x256xi1>
    %153 = vector.broadcast %152 : vector<1x256xi1> to vector<8x256xi1>
    %154 = vector.broadcast %cst_74 : f32 to vector<8x256xf32>
    %155 = arith.select %153, %146, %154 : vector<8x256xi1>, vector<8x256xf32>
    %c32_75 = arith.constant 32 : index
    %c0_76 = arith.constant 0 : index
    %156 = vector.load %arg14[%c32_75, %c0_76] : memref<200x256xf32, #tpu.memory_space<vmem>>, vector<8x256xf32>
    tpu.vector_store %arg14[%c32_75, %c0_76], %155 {strides = array<i32>} : memref<200x256xf32, #tpu.memory_space<vmem>>, vector<8x256xf32>,
    %c18_i32 = arith.constant 18 : i32
    %157 = tpu.dynamic_rotate %16 by %c18_i32 dim 1 : vector<8x256xf32>, i32 -> vector<8x256xf32>
    %c1_i32_77 = arith.constant 1 : i32
    %158 = vector.broadcast %c1_i32_77 : i32 to vector<1x256xi32>
    %159 = arith.cmpi sge, %2, %158 : vector<1x256xi32>
    %c2_i32_78 = arith.constant 2 : i32
    %160 = vector.broadcast %c2_i32_78 : i32 to vector<1x256xi32>
    %161 = arith.cmpi sge, %3, %160 : vector<1x256xi32>
    %162 = arith.andi %159, %161 : vector<1x256xi1>
    %cst_79 = arith.constant 0.000000e+00 : f32
    %163 = vector.shape_cast %162 : vector<1x256xi1> to vector<1x256xi1>
    %164 = vector.broadcast %163 : vector<1x256xi1> to vector<8x256xi1>
    %165 = vector.broadcast %cst_79 : f32 to vector<8x256xf32>
    %166 = arith.select %164, %157, %165 : vector<8x256xi1>, vector<8x256xf32>
    %c40_80 = arith.constant 40 : index
    %c0_81 = arith.constant 0 : index
    %167 = vector.load %arg14[%c40_80, %c0_81] : memref<200x256xf32, #tpu.memory_space<vmem>>, vector<8x256xf32>
    tpu.vector_store %arg14[%c40_80, %c0_81], %166 {strides = array<i32>} : memref<200x256xf32, #tpu.memory_space<vmem>>, vector<8x256xf32>,
    %c17_i32_82 = arith.constant 17 : i32
    %168 = tpu.dynamic_rotate %16 by %c17_i32_82 dim 1 : vector<8x256xf32>, i32 -> vector<8x256xf32>
    %c1_i32_83 = arith.constant 1 : i32
    %169 = vector.broadcast %c1_i32_83 : i32 to vector<1x256xi32>
    %170 = arith.cmpi sge, %2, %169 : vector<1x256xi32>
    %c1_i32_84 = arith.constant 1 : i32
    %171 = vector.broadcast %c1_i32_84 : i32 to vector<1x256xi32>
    %172 = arith.cmpi sge, %3, %171 : vector<1x256xi32>
    %173 = arith.andi %170, %172 : vector<1x256xi1>
    %cst_85 = arith.constant 0.000000e+00 : f32
    %174 = vector.shape_cast %173 : vector<1x256xi1> to vector<1x256xi1>
    %175 = vector.broadcast %174 : vector<1x256xi1> to vector<8x256xi1>
    %176 = vector.broadcast %cst_85 : f32 to vector<8x256xf32>
    %177 = arith.select %175, %168, %176 : vector<8x256xi1>, vector<8x256xf32>
    %c48_86 = arith.constant 48 : index
    %c0_87 = arith.constant 0 : index
    %178 = vector.load %arg14[%c48_86, %c0_87] : memref<200x256xf32, #tpu.memory_space<vmem>>, vector<8x256xf32>
    tpu.vector_store %arg14[%c48_86, %c0_87], %177 {strides = array<i32>} : memref<200x256xf32, #tpu.memory_space<vmem>>, vector<8x256xf32>,
    %c16_i32_88 = arith.constant 16 : i32
    %179 = tpu.dynamic_rotate %16 by %c16_i32_88 dim 1 : vector<8x256xf32>, i32 -> vector<8x256xf32>
    %c1_i32_89 = arith.constant 1 : i32
    %180 = vector.broadcast %c1_i32_89 : i32 to vector<1x256xi32>
    %181 = arith.cmpi sge, %2, %180 : vector<1x256xi32>
    %cst_90 = arith.constant 0.000000e+00 : f32
    %182 = vector.shape_cast %181 : vector<1x256xi1> to vector<1x256xi1>
    %183 = vector.broadcast %182 : vector<1x256xi1> to vector<8x256xi1>
    %184 = vector.broadcast %cst_90 : f32 to vector<8x256xf32>
    %185 = arith.select %183, %179, %184 : vector<8x256xi1>, vector<8x256xf32>
    %c56_91 = arith.constant 56 : index
    %c0_92 = arith.constant 0 : index
    %186 = vector.load %arg14[%c56_91, %c0_92] : memref<200x256xf32, #tpu.memory_space<vmem>>, vector<8x256xf32>
    tpu.vector_store %arg14[%c56_91, %c0_92], %185 {strides = array<i32>} : memref<200x256xf32, #tpu.memory_space<vmem>>, vector<8x256xf32>,
    %c15_i32_93 = arith.constant 15 : i32
    %187 = tpu.dynamic_rotate %16 by %c15_i32_93 dim 1 : vector<8x256xf32>, i32 -> vector<8x256xf32>
    %c1_i32_94 = arith.constant 1 : i32
    %188 = vector.broadcast %c1_i32_94 : i32 to vector<1x256xi32>
    %189 = arith.cmpi sge, %2, %188 : vector<1x256xi32>
    %c15_i32_95 = arith.constant 15 : i32
    %190 = vector.broadcast %c15_i32_95 : i32 to vector<1x256xi32>
    %191 = arith.cmpi slt, %3, %190 : vector<1x256xi32>
    %192 = arith.andi %189, %191 : vector<1x256xi1>
    %cst_96 = arith.constant 0.000000e+00 : f32
    %193 = vector.shape_cast %192 : vector<1x256xi1> to vector<1x256xi1>
    %194 = vector.broadcast %193 : vector<1x256xi1> to vector<8x256xi1>
    %195 = vector.broadcast %cst_96 : f32 to vector<8x256xf32>
    %196 = arith.select %194, %187, %195 : vector<8x256xi1>, vector<8x256xf32>
    %c64_97 = arith.constant 64 : index
    %c0_98 = arith.constant 0 : index
    %197 = vector.load %arg14[%c64_97, %c0_98] : memref<200x256xf32, #tpu.memory_space<vmem>>, vector<8x256xf32>
    tpu.vector_store %arg14[%c64_97, %c0_98], %196 {strides = array<i32>} : memref<200x256xf32, #tpu.memory_space<vmem>>, vector<8x256xf32>,
    %c14_i32_99 = arith.constant 14 : i32
    %198 = tpu.dynamic_rotate %16 by %c14_i32_99 dim 1 : vector<8x256xf32>, i32 -> vector<8x256xf32>
    %c1_i32_100 = arith.constant 1 : i32
    %199 = vector.broadcast %c1_i32_100 : i32 to vector<1x256xi32>
    %200 = arith.cmpi sge, %2, %199 : vector<1x256xi32>
    %c14_i32_101 = arith.constant 14 : i32
    %201 = vector.broadcast %c14_i32_101 : i32 to vector<1x256xi32>
    %202 = arith.cmpi slt, %3, %201 : vector<1x256xi32>
    %203 = arith.andi %200, %202 : vector<1x256xi1>
    %cst_102 = arith.constant 0.000000e+00 : f32
    %204 = vector.shape_cast %203 : vector<1x256xi1> to vector<1x256xi1>
    %205 = vector.broadcast %204 : vector<1x256xi1> to vector<8x256xi1>
    %206 = vector.broadcast %cst_102 : f32 to vector<8x256xf32>
    %207 = arith.select %205, %198, %206 : vector<8x256xi1>, vector<8x256xf32>
    %c72 = arith.constant 72 : index
    %c0_103 = arith.constant 0 : index
    %208 = vector.load %arg14[%c72, %c0_103] : memref<200x256xf32, #tpu.memory_space<vmem>>, vector<8x256xf32>
    tpu.vector_store %arg14[%c72, %c0_103], %207 {strides = array<i32>} : memref<200x256xf32, #tpu.memory_space<vmem>>, vector<8x256xf32>,
    %c2_i32_104 = arith.constant 2 : i32
    %209 = tpu.dynamic_rotate %16 by %c2_i32_104 dim 1 : vector<8x256xf32>, i32 -> vector<8x256xf32>
    %c2_i32_105 = arith.constant 2 : i32
    %210 = vector.broadcast %c2_i32_105 : i32 to vector<1x256xi32>
    %211 = arith.cmpi sge, %3, %210 : vector<1x256xi32>
    %cst_106 = arith.constant 0.000000e+00 : f32
    %212 = vector.shape_cast %211 : vector<1x256xi1> to vector<1x256xi1>
    %213 = vector.broadcast %212 : vector<1x256xi1> to vector<8x256xi1>
    %214 = vector.broadcast %cst_106 : f32 to vector<8x256xf32>
    %215 = arith.select %213, %209, %214 : vector<8x256xi1>, vector<8x256xf32>
    %c80 = arith.constant 80 : index
    %c0_107 = arith.constant 0 : index
    %216 = vector.load %arg14[%c80, %c0_107] : memref<200x256xf32, #tpu.memory_space<vmem>>, vector<8x256xf32>
    tpu.vector_store %arg14[%c80, %c0_107], %215 {strides = array<i32>} : memref<200x256xf32, #tpu.memory_space<vmem>>, vector<8x256xf32>,
    %c1_i32_108 = arith.constant 1 : i32
    %217 = tpu.dynamic_rotate %16 by %c1_i32_108 dim 1 : vector<8x256xf32>, i32 -> vector<8x256xf32>
    %c1_i32_109 = arith.constant 1 : i32
    %218 = vector.broadcast %c1_i32_109 : i32 to vector<1x256xi32>
    %219 = arith.cmpi sge, %3, %218 : vector<1x256xi32>
    %cst_110 = arith.constant 0.000000e+00 : f32
    %220 = vector.shape_cast %219 : vector<1x256xi1> to vector<1x256xi1>
    %221 = vector.broadcast %220 : vector<1x256xi1> to vector<8x256xi1>
    %222 = vector.broadcast %cst_110 : f32 to vector<8x256xf32>
    %223 = arith.select %221, %217, %222 : vector<8x256xi1>, vector<8x256xf32>
    %c88 = arith.constant 88 : index
    %c0_111 = arith.constant 0 : index
    %224 = vector.load %arg14[%c88, %c0_111] : memref<200x256xf32, #tpu.memory_space<vmem>>, vector<8x256xf32>
    tpu.vector_store %arg14[%c88, %c0_111], %223 {strides = array<i32>} : memref<200x256xf32, #tpu.memory_space<vmem>>, vector<8x256xf32>,
    %c96 = arith.constant 96 : index
    %c0_112 = arith.constant 0 : index
    %225 = vector.load %arg14[%c96, %c0_112] : memref<200x256xf32, #tpu.memory_space<vmem>>, vector<8x256xf32>
    tpu.vector_store %arg14[%c96, %c0_112], %16 {strides = array<i32>} : memref<200x256xf32, #tpu.memory_space<vmem>>, vector<8x256xf32>,
    %c255_i32_113 = arith.constant 255 : i32
    %226 = tpu.dynamic_rotate %16 by %c255_i32_113 dim 1 : vector<8x256xf32>, i32 -> vector<8x256xf32>
    %c15_i32_114 = arith.constant 15 : i32
    %227 = vector.broadcast %c15_i32_114 : i32 to vector<1x256xi32>
    %228 = arith.cmpi slt, %3, %227 : vector<1x256xi32>
    %cst_115 = arith.constant 0.000000e+00 : f32
    %229 = vector.shape_cast %228 : vector<1x256xi1> to vector<1x256xi1>
    %230 = vector.broadcast %229 : vector<1x256xi1> to vector<8x256xi1>
    %231 = vector.broadcast %cst_115 : f32 to vector<8x256xf32>
    %232 = arith.select %230, %226, %231 : vector<8x256xi1>, vector<8x256xf32>
    %c104 = arith.constant 104 : index
    %c0_116 = arith.constant 0 : index
    %233 = vector.load %arg14[%c104, %c0_116] : memref<200x256xf32, #tpu.memory_space<vmem>>, vector<8x256xf32>
    tpu.vector_store %arg14[%c104, %c0_116], %232 {strides = array<i32>} : memref<200x256xf32, #tpu.memory_space<vmem>>, vector<8x256xf32>,
    %c254_i32 = arith.constant 254 : i32
    %234 = tpu.dynamic_rotate %16 by %c254_i32 dim 1 : vector<8x256xf32>, i32 -> vector<8x256xf32>
    %c14_i32_117 = arith.constant 14 : i32
    %235 = vector.broadcast %c14_i32_117 : i32 to vector<1x256xi32>
    %236 = arith.cmpi slt, %3, %235 : vector<1x256xi32>
    %cst_118 = arith.constant 0.000000e+00 : f32
    %237 = vector.shape_cast %236 : vector<1x256xi1> to vector<1x256xi1>
    %238 = vector.broadcast %237 : vector<1x256xi1> to vector<8x256xi1>
    %239 = vector.broadcast %cst_118 : f32 to vector<8x256xf32>
    %240 = arith.select %238, %234, %239 : vector<8x256xi1>, vector<8x256xf32>
    %c112 = arith.constant 112 : index
    %c0_119 = arith.constant 0 : index
    %241 = vector.load %arg14[%c112, %c0_119] : memref<200x256xf32, #tpu.memory_space<vmem>>, vector<8x256xf32>
    tpu.vector_store %arg14[%c112, %c0_119], %240 {strides = array<i32>} : memref<200x256xf32, #tpu.memory_space<vmem>>, vector<8x256xf32>,
    %c242_i32 = arith.constant 242 : i32
    %242 = tpu.dynamic_rotate %16 by %c242_i32 dim 1 : vector<8x256xf32>, i32 -> vector<8x256xf32>
    %c15_i32_120 = arith.constant 15 : i32
    %243 = vector.broadcast %c15_i32_120 : i32 to vector<1x256xi32>
    %244 = arith.cmpi slt, %2, %243 : vector<1x256xi32>
    %c2_i32_121 = arith.constant 2 : i32
    %245 = vector.broadcast %c2_i32_121 : i32 to vector<1x256xi32>
    %246 = arith.cmpi sge, %3, %245 : vector<1x256xi32>
    %247 = arith.andi %244, %246 : vector<1x256xi1>
    %cst_122 = arith.constant 0.000000e+00 : f32
    %248 = vector.shape_cast %247 : vector<1x256xi1> to vector<1x256xi1>
    %249 = vector.broadcast %248 : vector<1x256xi1> to vector<8x256xi1>
    %250 = vector.broadcast %cst_122 : f32 to vector<8x256xf32>
    %251 = arith.select %249, %242, %250 : vector<8x256xi1>, vector<8x256xf32>
    %c120 = arith.constant 120 : index
    %c0_123 = arith.constant 0 : index
    %252 = vector.load %arg14[%c120, %c0_123] : memref<200x256xf32, #tpu.memory_space<vmem>>, vector<8x256xf32>
    tpu.vector_store %arg14[%c120, %c0_123], %251 {strides = array<i32>} : memref<200x256xf32, #tpu.memory_space<vmem>>, vector<8x256xf32>,
    %c241_i32_124 = arith.constant 241 : i32
    %253 = tpu.dynamic_rotate %16 by %c241_i32_124 dim 1 : vector<8x256xf32>, i32 -> vector<8x256xf32>
    %c15_i32_125 = arith.constant 15 : i32
    %254 = vector.broadcast %c15_i32_125 : i32 to vector<1x256xi32>
    %255 = arith.cmpi slt, %2, %254 : vector<1x256xi32>
    %c1_i32_126 = arith.constant 1 : i32
    %256 = vector.broadcast %c1_i32_126 : i32 to vector<1x256xi32>
    %257 = arith.cmpi sge, %3, %256 : vector<1x256xi32>
    %258 = arith.andi %255, %257 : vector<1x256xi1>
    %cst_127 = arith.constant 0.000000e+00 : f32
    %259 = vector.shape_cast %258 : vector<1x256xi1> to vector<1x256xi1>
    %260 = vector.broadcast %259 : vector<1x256xi1> to vector<8x256xi1>
    %261 = vector.broadcast %cst_127 : f32 to vector<8x256xf32>
    %262 = arith.select %260, %253, %261 : vector<8x256xi1>, vector<8x256xf32>
    %c128 = arith.constant 128 : index
    %c0_128 = arith.constant 0 : index
    %263 = vector.load %arg14[%c128, %c0_128] : memref<200x256xf32, #tpu.memory_space<vmem>>, vector<8x256xf32>
    tpu.vector_store %arg14[%c128, %c0_128], %262 {strides = array<i32>} : memref<200x256xf32, #tpu.memory_space<vmem>>, vector<8x256xf32>,
    %c240_i32_129 = arith.constant 240 : i32
    %264 = tpu.dynamic_rotate %16 by %c240_i32_129 dim 1 : vector<8x256xf32>, i32 -> vector<8x256xf32>
    %c15_i32_130 = arith.constant 15 : i32
    %265 = vector.broadcast %c15_i32_130 : i32 to vector<1x256xi32>
    %266 = arith.cmpi slt, %2, %265 : vector<1x256xi32>
    %cst_131 = arith.constant 0.000000e+00 : f32
    %267 = vector.shape_cast %266 : vector<1x256xi1> to vector<1x256xi1>
    %268 = vector.broadcast %267 : vector<1x256xi1> to vector<8x256xi1>
    %269 = vector.broadcast %cst_131 : f32 to vector<8x256xf32>
    %270 = arith.select %268, %264, %269 : vector<8x256xi1>, vector<8x256xf32>
    %c136 = arith.constant 136 : index
    %c0_132 = arith.constant 0 : index
    %271 = vector.load %arg14[%c136, %c0_132] : memref<200x256xf32, #tpu.memory_space<vmem>>, vector<8x256xf32>
    tpu.vector_store %arg14[%c136, %c0_132], %270 {strides = array<i32>} : memref<200x256xf32, #tpu.memory_space<vmem>>, vector<8x256xf32>,
    %c239_i32_133 = arith.constant 239 : i32
    %272 = tpu.dynamic_rotate %16 by %c239_i32_133 dim 1 : vector<8x256xf32>, i32 -> vector<8x256xf32>
    %c15_i32_134 = arith.constant 15 : i32
    %273 = vector.broadcast %c15_i32_134 : i32 to vector<1x256xi32>
    %274 = arith.cmpi slt, %2, %273 : vector<1x256xi32>
    %c15_i32_135 = arith.constant 15 : i32
    %275 = vector.broadcast %c15_i32_135 : i32 to vector<1x256xi32>
    %276 = arith.cmpi slt, %3, %275 : vector<1x256xi32>
    %277 = arith.andi %274, %276 : vector<1x256xi1>
    %cst_136 = arith.constant 0.000000e+00 : f32
    %278 = vector.shape_cast %277 : vector<1x256xi1> to vector<1x256xi1>
    %279 = vector.broadcast %278 : vector<1x256xi1> to vector<8x256xi1>
    %280 = vector.broadcast %cst_136 : f32 to vector<8x256xf32>
    %281 = arith.select %279, %272, %280 : vector<8x256xi1>, vector<8x256xf32>
    %c144 = arith.constant 144 : index
    %c0_137 = arith.constant 0 : index
    %282 = vector.load %arg14[%c144, %c0_137] : memref<200x256xf32, #tpu.memory_space<vmem>>, vector<8x256xf32>
    tpu.vector_store %arg14[%c144, %c0_137], %281 {strides = array<i32>} : memref<200x256xf32, #tpu.memory_space<vmem>>, vector<8x256xf32>,
    %c238_i32 = arith.constant 238 : i32
    %283 = tpu.dynamic_rotate %16 by %c238_i32 dim 1 : vector<8x256xf32>, i32 -> vector<8x256xf32>
    %c15_i32_138 = arith.constant 15 : i32
    %284 = vector.broadcast %c15_i32_138 : i32 to vector<1x256xi32>
    %285 = arith.cmpi slt, %2, %284 : vector<1x256xi32>
    %c14_i32_139 = arith.constant 14 : i32
    %286 = vector.broadcast %c14_i32_139 : i32 to vector<1x256xi32>
    %287 = arith.cmpi slt, %3, %286 : vector<1x256xi32>
    %288 = arith.andi %285, %287 : vector<1x256xi1>
    %cst_140 = arith.constant 0.000000e+00 : f32
    %289 = vector.shape_cast %288 : vector<1x256xi1> to vector<1x256xi1>
    %290 = vector.broadcast %289 : vector<1x256xi1> to vector<8x256xi1>
    %291 = vector.broadcast %cst_140 : f32 to vector<8x256xf32>
    %292 = arith.select %290, %283, %291 : vector<8x256xi1>, vector<8x256xf32>
    %c152 = arith.constant 152 : index
    %c0_141 = arith.constant 0 : index
    %293 = vector.load %arg14[%c152, %c0_141] : memref<200x256xf32, #tpu.memory_space<vmem>>, vector<8x256xf32>
    tpu.vector_store %arg14[%c152, %c0_141], %292 {strides = array<i32>} : memref<200x256xf32, #tpu.memory_space<vmem>>, vector<8x256xf32>,
    %c226_i32 = arith.constant 226 : i32
    %294 = tpu.dynamic_rotate %16 by %c226_i32 dim 1 : vector<8x256xf32>, i32 -> vector<8x256xf32>
    %c14_i32_142 = arith.constant 14 : i32
    %295 = vector.broadcast %c14_i32_142 : i32 to vector<1x256xi32>
    %296 = arith.cmpi slt, %2, %295 : vector<1x256xi32>
    %c2_i32_143 = arith.constant 2 : i32
    %297 = vector.broadcast %c2_i32_143 : i32 to vector<1x256xi32>
    %298 = arith.cmpi sge, %3, %297 : vector<1x256xi32>
    %299 = arith.andi %296, %298 : vector<1x256xi1>
    %cst_144 = arith.constant 0.000000e+00 : f32
    %300 = vector.shape_cast %299 : vector<1x256xi1> to vector<1x256xi1>
    %301 = vector.broadcast %300 : vector<1x256xi1> to vector<8x256xi1>
    %302 = vector.broadcast %cst_144 : f32 to vector<8x256xf32>
    %303 = arith.select %301, %294, %302 : vector<8x256xi1>, vector<8x256xf32>
    %c160 = arith.constant 160 : index
    %c0_145 = arith.constant 0 : index
    %304 = vector.load %arg14[%c160, %c0_145] : memref<200x256xf32, #tpu.memory_space<vmem>>, vector<8x256xf32>
    tpu.vector_store %arg14[%c160, %c0_145], %303 {strides = array<i32>} : memref<200x256xf32, #tpu.memory_space<vmem>>, vector<8x256xf32>,
    %c225_i32 = arith.constant 225 : i32
    %305 = tpu.dynamic_rotate %16 by %c225_i32 dim 1 : vector<8x256xf32>, i32 -> vector<8x256xf32>
    %c14_i32_146 = arith.constant 14 : i32
    %306 = vector.broadcast %c14_i32_146 : i32 to vector<1x256xi32>
    %307 = arith.cmpi slt, %2, %306 : vector<1x256xi32>
    %c1_i32_147 = arith.constant 1 : i32
    %308 = vector.broadcast %c1_i32_147 : i32 to vector<1x256xi32>
    %309 = arith.cmpi sge, %3, %308 : vector<1x256xi32>
    %310 = arith.andi %307, %309 : vector<1x256xi1>
    %cst_148 = arith.constant 0.000000e+00 : f32
    %311 = vector.shape_cast %310 : vector<1x256xi1> to vector<1x256xi1>
    %312 = vector.broadcast %311 : vector<1x256xi1> to vector<8x256xi1>
    %313 = vector.broadcast %cst_148 : f32 to vector<8x256xf32>
    %314 = arith.select %312, %305, %313 : vector<8x256xi1>, vector<8x256xf32>
    %c168 = arith.constant 168 : index
    %c0_149 = arith.constant 0 : index
    %315 = vector.load %arg14[%c168, %c0_149] : memref<200x256xf32, #tpu.memory_space<vmem>>, vector<8x256xf32>
    tpu.vector_store %arg14[%c168, %c0_149], %314 {strides = array<i32>} : memref<200x256xf32, #tpu.memory_space<vmem>>, vector<8x256xf32>,
    %c224_i32 = arith.constant 224 : i32
    %316 = tpu.dynamic_rotate %16 by %c224_i32 dim 1 : vector<8x256xf32>, i32 -> vector<8x256xf32>
    %c14_i32_150 = arith.constant 14 : i32
    %317 = vector.broadcast %c14_i32_150 : i32 to vector<1x256xi32>
    %318 = arith.cmpi slt, %2, %317 : vector<1x256xi32>
    %cst_151 = arith.constant 0.000000e+00 : f32
    %319 = vector.shape_cast %318 : vector<1x256xi1> to vector<1x256xi1>
    %320 = vector.broadcast %319 : vector<1x256xi1> to vector<8x256xi1>
    %321 = vector.broadcast %cst_151 : f32 to vector<8x256xf32>
    %322 = arith.select %320, %316, %321 : vector<8x256xi1>, vector<8x256xf32>
    %c176 = arith.constant 176 : index
    %c0_152 = arith.constant 0 : index
    %323 = vector.load %arg14[%c176, %c0_152] : memref<200x256xf32, #tpu.memory_space<vmem>>, vector<8x256xf32>
    tpu.vector_store %arg14[%c176, %c0_152], %322 {strides = array<i32>} : memref<200x256xf32, #tpu.memory_space<vmem>>, vector<8x256xf32>,
    %c223_i32 = arith.constant 223 : i32
    %324 = tpu.dynamic_rotate %16 by %c223_i32 dim 1 : vector<8x256xf32>, i32 -> vector<8x256xf32>
    %c14_i32_153 = arith.constant 14 : i32
    %325 = vector.broadcast %c14_i32_153 : i32 to vector<1x256xi32>
    %326 = arith.cmpi slt, %2, %325 : vector<1x256xi32>
    %c15_i32_154 = arith.constant 15 : i32
    %327 = vector.broadcast %c15_i32_154 : i32 to vector<1x256xi32>
    %328 = arith.cmpi slt, %3, %327 : vector<1x256xi32>
    %329 = arith.andi %326, %328 : vector<1x256xi1>
    %cst_155 = arith.constant 0.000000e+00 : f32
    %330 = vector.shape_cast %329 : vector<1x256xi1> to vector<1x256xi1>
    %331 = vector.broadcast %330 : vector<1x256xi1> to vector<8x256xi1>
    %332 = vector.broadcast %cst_155 : f32 to vector<8x256xf32>
    %333 = arith.select %331, %324, %332 : vector<8x256xi1>, vector<8x256xf32>
    %c184 = arith.constant 184 : index
    %c0_156 = arith.constant 0 : index
    %334 = vector.load %arg14[%c184, %c0_156] : memref<200x256xf32, #tpu.memory_space<vmem>>, vector<8x256xf32>
    tpu.vector_store %arg14[%c184, %c0_156], %333 {strides = array<i32>} : memref<200x256xf32, #tpu.memory_space<vmem>>, vector<8x256xf32>,
    %c222_i32 = arith.constant 222 : i32
    %335 = tpu.dynamic_rotate %16 by %c222_i32 dim 1 : vector<8x256xf32>, i32 -> vector<8x256xf32>
    %c14_i32_157 = arith.constant 14 : i32
    %336 = vector.broadcast %c14_i32_157 : i32 to vector<1x256xi32>
    %337 = arith.cmpi slt, %2, %336 : vector<1x256xi32>
    %c14_i32_158 = arith.constant 14 : i32
    %338 = vector.broadcast %c14_i32_158 : i32 to vector<1x256xi32>
    %339 = arith.cmpi slt, %3, %338 : vector<1x256xi32>
    %340 = arith.andi %337, %339 : vector<1x256xi1>
    %cst_159 = arith.constant 0.000000e+00 : f32
    %341 = vector.shape_cast %340 : vector<1x256xi1> to vector<1x256xi1>
    %342 = vector.broadcast %341 : vector<1x256xi1> to vector<8x256xi1>
    %343 = vector.broadcast %cst_159 : f32 to vector<8x256xf32>
    %344 = arith.select %342, %335, %343 : vector<8x256xi1>, vector<8x256xf32>
    %c192 = arith.constant 192 : index
    %c0_160 = arith.constant 0 : index
    %345 = vector.load %arg14[%c192, %c0_160] : memref<200x256xf32, #tpu.memory_space<vmem>>, vector<8x256xf32>
    tpu.vector_store %arg14[%c192, %c0_160], %344 {strides = array<i32>} : memref<200x256xf32, #tpu.memory_space<vmem>>, vector<8x256xf32>,
    %c0_161 = arith.constant 0 : index
    %c0_162 = arith.constant 0 : index
    %346 = vector.load %arg8[%c0_161, %c0_162] : memref<8x200xf32, #tpu.memory_space<vmem>>, vector<8x200xf32>
    %c0_163 = arith.constant 0 : index
    %c0_164 = arith.constant 0 : index
    %347 = vector.load %arg14[%c0_163, %c0_164] : memref<200x256xf32, #tpu.memory_space<vmem>>, vector<200x256xf32>
    %c0_165 = arith.constant 0 : index
    %c0_166 = arith.constant 0 : index
    %348 = vector.load %arg9[%c0_165, %c0_166] : memref<8x1xf32, #tpu.memory_space<vmem>>, vector<8x1xf32>
    %cst_167 = arith.constant dense<0.000000e+00> : vector<8x256xf32>
    %349 = tpu.matmul %346, %347, %cst_167 {dimension_numbers = #tpu.dot_dimension_numbers<[1], [0], [0], [1], [0, 0, 1, 1], [], []>} : vector<8x200xf32>, vector<200x256xf32>, vector<8x256xf32> -> vector<8x256xf32>
    %350 = vector.broadcast %348 : vector<8x1xf32> to vector<8x256xf32>
    %351 = arith.addf %349, %350 : vector<8x256xf32>
    %cst_168 = arith.constant 0.000000e+00 : f32
    %352 = vector.broadcast %cst_168 : f32 to vector<8x256xf32>
    %353 = arith.maximumf %351, %352 : vector<8x256xf32>
    %c0_169 = arith.constant 0 : index
    %c16_170 = arith.constant 16 : index
    %c0_171 = arith.constant 0 : index
    %354 = vector.load %arg12[%c0_169, %c16_170, %c0_171] : memref<1x32x256xf32, #tpu.memory_space<vmem>>, vector<1x8x256xf32>
    %355 = vector.shape_cast %354 : vector<1x8x256xf32> to vector<8x256xf32>
    %356 = vector.shape_cast %353 : vector<8x256xf32> to vector<1x8x256xf32>
    tpu.vector_store %arg12[%c0_169, %c16_170, %c0_171], %356 {strides = array<i32>} : memref<1x32x256xf32, #tpu.memory_space<vmem>>, vector<1x8x256xf32>,
    %c16_i32_172 = arith.constant 16 : i32
    %357 = tpu.dynamic_rotate %1 by %c16_i32_172 dim 1 : vector<4x256xf32>, i32 -> vector<4x256xf32>
    %c1_i32_173 = arith.constant 1 : i32
    %358 = vector.broadcast %c1_i32_173 : i32 to vector<1x256xi32>
    %359 = arith.cmpi sge, %2, %358 : vector<1x256xi32>
    %cst_174 = arith.constant 0xFF800000 : f32
    %360 = vector.shape_cast %359 : vector<1x256xi1> to vector<1x256xi1>
    %361 = vector.broadcast %360 : vector<1x256xi1> to vector<4x256xi1>
    %362 = vector.broadcast %cst_174 : f32 to vector<4x256xf32>
    %363 = arith.select %361, %357, %362 : vector<4x256xi1>, vector<4x256xf32>
    %364 = arith.maximumf %363, %1 : vector<4x256xf32>
    %c240_i32_175 = arith.constant 240 : i32
    %365 = tpu.dynamic_rotate %1 by %c240_i32_175 dim 1 : vector<4x256xf32>, i32 -> vector<4x256xf32>
    %c15_i32_176 = arith.constant 15 : i32
    %366 = vector.broadcast %c15_i32_176 : i32 to vector<1x256xi32>
    %367 = arith.cmpi slt, %2, %366 : vector<1x256xi32>
    %cst_177 = arith.constant 0xFF800000 : f32
    %368 = vector.shape_cast %367 : vector<1x256xi1> to vector<1x256xi1>
    %369 = vector.broadcast %368 : vector<1x256xi1> to vector<4x256xi1>
    %370 = vector.broadcast %cst_177 : f32 to vector<4x256xf32>
    %371 = arith.select %369, %365, %370 : vector<4x256xi1>, vector<4x256xf32>
    %372 = arith.maximumf %364, %371 : vector<4x256xf32>
    %c1_i32_178 = arith.constant 1 : i32
    %373 = tpu.dynamic_rotate %372 by %c1_i32_178 dim 1 : vector<4x256xf32>, i32 -> vector<4x256xf32>
    %c1_i32_179 = arith.constant 1 : i32
    %374 = vector.broadcast %c1_i32_179 : i32 to vector<1x256xi32>
    %375 = arith.cmpi sge, %3, %374 : vector<1x256xi32>
    %cst_180 = arith.constant 0xFF800000 : f32
    %376 = vector.shape_cast %375 : vector<1x256xi1> to vector<1x256xi1>
    %377 = vector.broadcast %376 : vector<1x256xi1> to vector<4x256xi1>
    %378 = vector.broadcast %cst_180 : f32 to vector<4x256xf32>
    %379 = arith.select %377, %373, %378 : vector<4x256xi1>, vector<4x256xf32>
    %380 = arith.maximumf %379, %372 : vector<4x256xf32>
    %c255_i32_181 = arith.constant 255 : i32
    %381 = tpu.dynamic_rotate %372 by %c255_i32_181 dim 1 : vector<4x256xf32>, i32 -> vector<4x256xf32>
    %c15_i32_182 = arith.constant 15 : i32
    %382 = vector.broadcast %c15_i32_182 : i32 to vector<1x256xi32>
    %383 = arith.cmpi slt, %3, %382 : vector<1x256xi32>
    %cst_183 = arith.constant 0xFF800000 : f32
    %384 = vector.shape_cast %383 : vector<1x256xi1> to vector<1x256xi1>
    %385 = vector.broadcast %384 : vector<1x256xi1> to vector<4x256xi1>
    %386 = vector.broadcast %cst_183 : f32 to vector<4x256xf32>
    %387 = arith.select %385, %381, %386 : vector<4x256xi1>, vector<4x256xf32>
    %388 = arith.maximumf %380, %387 : vector<4x256xf32>
    %c0_184 = arith.constant 0 : index
    %c0_185 = arith.constant 0 : index
    %389 = vector.load %arg10[%c0_184, %c0_185] : memref<8x4xf32, #tpu.memory_space<vmem>>, vector<8x4xf32>
    %c0_186 = arith.constant 0 : index
    %c0_187 = arith.constant 0 : index
    %390 = vector.load %arg11[%c0_186, %c0_187] : memref<8x1xf32, #tpu.memory_space<vmem>>, vector<8x1xf32>
    %cst_188 = arith.constant dense<0.000000e+00> : vector<8x256xf32>
    %391 = tpu.matmul %389, %388, %cst_188 {dimension_numbers = #tpu.dot_dimension_numbers<[1], [0], [0], [1], [0, 0, 1, 1], [], []>} : vector<8x4xf32>, vector<4x256xf32>, vector<8x256xf32> -> vector<8x256xf32>
    %392 = vector.broadcast %390 : vector<8x1xf32> to vector<8x256xf32>
    %393 = arith.addf %391, %392 : vector<8x256xf32>
    %cst_189 = arith.constant 0.000000e+00 : f32
    %394 = vector.broadcast %cst_189 : f32 to vector<8x256xf32>
    %395 = arith.maximumf %393, %394 : vector<8x256xf32>
    %c0_190 = arith.constant 0 : index
    %c24_191 = arith.constant 24 : index
    %c0_192 = arith.constant 0 : index
    %396 = vector.load %arg12[%c0_190, %c24_191, %c0_192] : memref<1x32x256xf32, #tpu.memory_space<vmem>>, vector<1x8x256xf32>
    %397 = vector.shape_cast %396 : vector<1x8x256xf32> to vector<8x256xf32>
    %398 = vector.shape_cast %395 : vector<8x256xf32> to vector<1x8x256xf32>
    tpu.vector_store %arg12[%c0_190, %c24_191, %c0_192], %398 {strides = array<i32>} : memref<1x32x256xf32, #tpu.memory_space<vmem>>, vector<1x8x256xf32>,
    return
  }
  func.func @transform_0(%arg0: i32) -> (i32, i32, i32) {
    %c0_i32 = arith.constant 0 : i32
    %c0_i32_0 = arith.constant 0 : i32
    %c0_i32_1 = arith.constant 0 : i32
    return %arg0, %c0_i32, %c0_i32_0 : i32, i32, i32
  }
  func.func @transform_1(%arg0: i32) -> (i32, i32) {
    %c0_i32 = arith.constant 0 : i32
    %c0_i32_0 = arith.constant 0 : i32
    %c0_i32_1 = arith.constant 0 : i32
    return %c0_i32, %c0_i32_0 : i32, i32
  }
  func.func @transform_2(%arg0: i32) -> (i32, i32) {
    %c0_i32 = arith.constant 0 : i32
    %c0_i32_0 = arith.constant 0 : i32
    %c0_i32_1 = arith.constant 0 : i32
    return %c0_i32, %c0_i32_0 : i32, i32
  }
  func.func @transform_3(%arg0: i32) -> (i32, i32) {
    %c0_i32 = arith.constant 0 : i32
    %c0_i32_0 = arith.constant 0 : i32
    %c0_i32_1 = arith.constant 0 : i32
    return %c0_i32, %c0_i32_0 : i32, i32
  }
  func.func @transform_4(%arg0: i32) -> (i32, i32) {
    %c0_i32 = arith.constant 0 : i32
    %c0_i32_0 = arith.constant 0 : i32
    %c0_i32_1 = arith.constant 0 : i32
    return %c0_i32, %c0_i32_0 : i32, i32
  }
  func.func @transform_5(%arg0: i32) -> (i32, i32) {
    %c0_i32 = arith.constant 0 : i32
    %c0_i32_0 = arith.constant 0 : i32
    %c0_i32_1 = arith.constant 0 : i32
    return %c0_i32, %c0_i32_0 : i32, i32
  }
  func.func @transform_6(%arg0: i32) -> (i32, i32) {
    %c0_i32 = arith.constant 0 : i32
    %c0_i32_0 = arith.constant 0 : i32
    %c0_i32_1 = arith.constant 0 : i32
    return %c0_i32, %c0_i32_0 : i32, i32
  }
  func.func @transform_7(%arg0: i32) -> (i32, i32) {
    %c0_i32 = arith.constant 0 : i32
    %c0_i32_0 = arith.constant 0 : i32
    %c0_i32_1 = arith.constant 0 : i32
    return %c0_i32, %c0_i32_0 : i32, i32
  }
  func.func @transform_8(%arg0: i32) -> (i32, i32) {
    %c0_i32 = arith.constant 0 : i32
    %c0_i32_0 = arith.constant 0 : i32
    %c0_i32_1 = arith.constant 0 : i32
    return %c0_i32, %c0_i32_0 : i32, i32
  }
  func.func @transform_9(%arg0: i32) -> (i32, i32) {
    %c0_i32 = arith.constant 0 : i32
    %c0_i32_0 = arith.constant 0 : i32
    %c0_i32_1 = arith.constant 0 : i32
    return %c0_i32, %c0_i32_0 : i32, i32
  }
  func.func @transform_10(%arg0: i32) -> (i32, i32) {
    %c0_i32 = arith.constant 0 : i32
    %c0_i32_0 = arith.constant 0 : i32
    %c0_i32_1 = arith.constant 0 : i32
    return %c0_i32, %c0_i32_0 : i32, i32
  }
  func.func @transform_11(%arg0: i32) -> (i32, i32, i32) {
    %c0_i32 = arith.constant 0 : i32
    %c0_i32_0 = arith.constant 0 : i32
    %c0_i32_1 = arith.constant 0 : i32
    return %arg0, %c0_i32, %c0_i32_0 : i32, i32, i32
  }
}

</mosaic_0001>

<llo_original>
// kernel: tpu_custom_call.1
$region0: #{tpu_custom_call.1}
  #allocation0 [shape = 'u32[]', space=smem, size = 0x4, offset = 0x4, fixed_abs, tag = 'smem constant byte address 0x4 - core index']
  #allocation1 [shape = 'u32[144,128]{1,0:T(1,128)}', space=vmem, size = 0x12000, scoped, tag = 'internal scratch']
  #allocation2 [shape = 'f32[72,256]{1,0:T(8,128)}', space=vmem, size = 0x12000, scoped, tag = 'scratch operand']
  #allocation3 [shape = 'f32[200,256]{1,0:T(8,128)}', space=vmem, size = 0x32000, scoped, tag = 'scratch operand']
  %s0 = inlined_call_operand.vmem [shape: f32[2,4,256], index: 0, kind: input, shape index: {}]
  %s1 = inlined_call_operand.vmem [shape: s32[1,256], index: 1, kind: input, shape index: {}]
  %s2 = inlined_call_operand.vmem [shape: s32[1,256], index: 2, kind: input, shape index: {}]
  %s3 = inlined_call_operand.vmem [shape: f32[24,4], index: 3, kind: input, shape index: {}]
  %s4 = inlined_call_operand.vmem [shape: f32[24,1], index: 4, kind: input, shape index: {}]
  %s5 = inlined_call_operand.vmem [shape: f32[8,72], index: 5, kind: input, shape index: {}]
  %s6 = inlined_call_operand.vmem [shape: f32[8,1], index: 6, kind: input, shape index: {}]
  %s7 = inlined_call_operand.vmem [shape: f32[8,200], index: 7, kind: input, shape index: {}]
  %s8 = inlined_call_operand.vmem [shape: f32[8,1], index: 8, kind: input, shape index: {}]
  %s9 = inlined_call_operand.vmem [shape: f32[8,4], index: 9, kind: input, shape index: {}]
  %s10 = inlined_call_operand.vmem [shape: f32[8,1], index: 10, kind: input, shape index: {}]
  %s11 = inlined_call_operand.hbm [shape: f32[2,32,256], index: 11, kind: output, shape index: {}]
  %s12 = sld [smem:[#allocation0]]
  $region77: #{tpu_custom_call.1} parent=0
    _
  %s14 = ssub.s32 1, %s12
  %s15 = scalar_select 0, %s14, %s12
  $region1: #{tpu_custom_call.1} parent=0
    #allocation4 [shape = 'u8[65536]{0}', space=vmem, size = 0x10000, scoped, tag = 'output window, operand 0']
    #allocation5 [shape = 's32[2]{0}', space=sflag, size = 0x8, scoped, tag = 'scoped memory for tpu_custom_call.1']
    %16 = vsyncpa [#allocation5], 0
    %s17 = scalar_lea.sflag [#allocation5], 1
    %18 = vsyncpa %s17, 0
    loop: start=0, step=1, limit=4
    $region2: #{tpu_custom_call.1} parent=1 // loop_pre_header
      _
    $region3: #{tpu_custom_call.1} parent=1 // loop_header
      %s20 = sphi 0, %s24
      %p21 = scmp.ge.s32.totalorder %s20, 4
      %s30 = sphi 0, %s32
      %s33 = sphi 0, %s30
      %s34 = sphi 0, %s33
      %s50 = sphi 0, %s34
      %s54 = sphi 0, %s54
      %s56 = sphi 0, %s54
      %s57 = sphi 0, %s56
      %s71 = sphi 0, %s57
      %s75 = sphi 0, %s75
      %s77 = sphi 0, %s75
      %s78 = sphi 0, %s77
      %s92 = sphi 0, %s78
      %s96 = sphi 0, %s96
      %s98 = sphi 0, %s96
      %s99 = sphi 0, %s98
      %s113 = sphi 0, %s99
      %s117 = sphi 0, %s117
      %s119 = sphi 0, %s117
      %s120 = sphi 0, %s119
      %s134 = sphi 0, %s120
      %s138 = sphi 0, %s138
      %s140 = sphi 0, %s138
      %s141 = sphi 0, %s140
      %s155 = sphi 0, %s141
      %s159 = sphi 0, %s159
      %s161 = sphi 0, %s159
      %s162 = sphi 0, %s161
      %s176 = sphi 0, %s162
      %s180 = sphi 0, %s180
      %s182 = sphi 0, %s180
      %s183 = sphi 0, %s182
      %s197 = sphi 0, %s183
      %s201 = sphi 0, %s201
      %s203 = sphi 0, %s201
      %s204 = sphi 0, %s203
      %s218 = sphi 0, %s204
      %s222 = sphi 0, %s222
      %s224 = sphi 0, %s222
      %s225 = sphi 0, %s224
      %s239 = sphi 0, %s225
      %s243 = sphi 0, %s243
      %s245 = sphi 0, %s243
      %s246 = sphi 0, %s245
      %s260 = sphi 0, %s246
      %s266 = sphi 0, %s268
      %s269 = sphi 0, %s266
      %s270 = sphi 0, %s269
      %s286 = sphi 0, %s270
    $region4: #{tpu_custom_call.1} parent=1 // loop_header_branch
      %23 = sbr.rel (%p21) target = $region8
    $region5: #{tpu_custom_call.1} parent=1 // loop_body
      %s25 = ssub.s32 %s20, 1
      %s26 = ssub.s32 %s20, 2
      %s27 = sadd.s32 %s20, 1
      %s28 = ssub.s32 %s20, %s27
      %p29 = scmp.eq.s32.totalorder %s28, 0
      %s31 = sadd.s32 %s30, 1
      %s32 = scalar_select %p29, %s30, %s31
      %p35 = pneg %p29
      %p36 = scmp.eq.s32.totalorder %s20, 1
      %p37 = por %p35, %p36
      %p38 = scmp.ne.s32.totalorder %s30, %s33
      %p39 = scmp.eq.s32.totalorder %s20, 0
      %p40 = por %p38, %p39
      %p41 = scmp.ne.s32.totalorder %s30, %s33
      %p42 = scmp.eq.s32.totalorder %s25, 1
      %p43 = por %p41, %p42
      %p44 = scmp.ne.s32.totalorder %s33, %s34
      %p45 = scmp.eq.s32.totalorder %s25, 0
      %p46 = por %p44, %p45
      %p47 = scmp.ne.s32.totalorder %s33, %s34
      %p48 = scmp.eq.s32.totalorder %s26, 1
      %p49 = por %p47, %p48
      %p51 = scmp.ne.s32.totalorder %s34, %s50
      %p52 = scmp.eq.s32.totalorder %s26, 0
      %p53 = por %p51, %p52
      %s55 = sadd.s32 %s54, 1
      %p58 = scmp.eq.s32.totalorder %s20, 1
      %p59 = scmp.ne.s32.totalorder %s54, %s56
      %p60 = scmp.eq.s32.totalorder %s20, 0
      %p61 = por %p59, %p60
      %p62 = scmp.ne.s32.totalorder %s54, %s56
      %p63 = scmp.eq.s32.totalorder %s25, 1
      %p64 = por %p62, %p63
      %p65 = scmp.ne.s32.totalorder %s56, %s57
      %p66 = scmp.eq.s32.totalorder %s25, 0
      %p67 = por %p65, %p66
      %p68 = scmp.ne.s32.totalorder %s56, %s57
      %p69 = scmp.eq.s32.totalorder %s26, 1
      %p70 = por %p68, %p69
      %p72 = scmp.ne.s32.totalorder %s57, %s71
      %p73 = scmp.eq.s32.totalorder %s26, 0
      %p74 = por %p72, %p73
      %s76 = sadd.s32 %s75, 1
      %p79 = scmp.eq.s32.totalorder %s20, 1
      %p80 = scmp.ne.s32.totalorder %s75, %s77
      %p81 = scmp.eq.s32.totalorder %s20, 0
      %p82 = por %p80, %p81
      %p83 = scmp.ne.s32.totalorder %s75, %s77
      %p84 = scmp.eq.s32.totalorder %s25, 1
      %p85 = por %p83, %p84
      %p86 = scmp.ne.s32.totalorder %s77, %s78
      %p87 = scmp.eq.s32.totalorder %s25, 0
      %p88 = por %p86, %p87
      %p89 = scmp.ne.s32.totalorder %s77, %s78
      %p90 = scmp.eq.s32.totalorder %s26, 1
      %p91 = por %p89, %p90
      %p93 = scmp.ne.s32.totalorder %s78, %s92
      %p94 = scmp.eq.s32.totalorder %s26, 0
      %p95 = por %p93, %p94
      %s97 = sadd.s32 %s96, 1
      %p100 = scmp.eq.s32.totalorder %s20, 1
      %p101 = scmp.ne.s32.totalorder %s96, %s98
      %p102 = scmp.eq.s32.totalorder %s20, 0
      %p103 = por %p101, %p102
      %p104 = scmp.ne.s32.totalorder %s96, %s98
      %p105 = scmp.eq.s32.totalorder %s25, 1
      %p106 = por %p104, %p105
      %p107 = scmp.ne.s32.totalorder %s98, %s99
      %p108 = scmp.eq.s32.totalorder %s25, 0
      %p109 = por %p107, %p108
      %p110 = scmp.ne.s32.totalorder %s98, %s99
      %p111 = scmp.eq.s32.totalorder %s26, 1
      %p112 = por %p110, %p111
      %p114 = scmp.ne.s32.totalorder %s99, %s113
      %p115 = scmp.eq.s32.totalorder %s26, 0
      %p116 = por %p114, %p115
      %s118 = sadd.s32 %s117, 1
      %p121 = scmp.eq.s32.totalorder %s20, 1
      %p122 = scmp.ne.s32.totalorder %s117, %s119
      %p123 = scmp.eq.s32.totalorder %s20, 0
      %p124 = por %p122, %p123
      %p125 = scmp.ne.s32.totalorder %s117, %s119
      %p126 = scmp.eq.s32.totalorder %s25, 1
      %p127 = por %p125, %p126
      %p128 = scmp.ne.s32.totalorder %s119, %s120
      %p129 = scmp.eq.s32.totalorder %s25, 0
      %p130 = por %p128, %p129
      %p131 = scmp.ne.s32.totalorder %s119, %s120
      %p132 = scmp.eq.s32.totalorder %s26, 1
      %p133 = por %p131, %p132
      %p135 = scmp.ne.s32.totalorder %s120, %s134
      %p136 = scmp.eq.s32.totalorder %s26, 0
      %p137 = por %p135, %p136
      %s139 = sadd.s32 %s138, 1
      %p142 = scmp.eq.s32.totalorder %s20, 1
      %p143 = scmp.ne.s32.totalorder %s138, %s140
      %p144 = scmp.eq.s32.totalorder %s20, 0
      %p145 = por %p143, %p144
      %p146 = scmp.ne.s32.totalorder %s138, %s140
      %p147 = scmp.eq.s32.totalorder %s25, 1
      %p148 = por %p146, %p147
      %p149 = scmp.ne.s32.totalorder %s140, %s141
      %p150 = scmp.eq.s32.totalorder %s25, 0
      %p151 = por %p149, %p150
      %p152 = scmp.ne.s32.totalorder %s140, %s141
      %p153 = scmp.eq.s32.totalorder %s26, 1
      %p154 = por %p152, %p153
      %p156 = scmp.ne.s32.totalorder %s141, %s155
      %p157 = scmp.eq.s32.totalorder %s26, 0
      %p158 = por %p156, %p157
      %s160 = sadd.s32 %s159, 1
      %p163 = scmp.eq.s32.totalorder %s20, 1
      %p164 = scmp.ne.s32.totalorder %s159, %s161
      %p165 = scmp.eq.s32.totalorder %s20, 0
      %p166 = por %p164, %p165
      %p167 = scmp.ne.s32.totalorder %s159, %s161
      %p168 = scmp.eq.s32.totalorder %s25, 1
      %p169 = por %p167, %p168
      %p170 = scmp.ne.s32.totalorder %s161, %s162
      %p171 = scmp.eq.s32.totalorder %s25, 0
      %p172 = por %p170, %p171
      %p173 = scmp.ne.s32.totalorder %s161, %s162
      %p174 = scmp.eq.s32.totalorder %s26, 1
      %p175 = por %p173, %p174
      %p177 = scmp.ne.s32.totalorder %s162, %s176
      %p178 = scmp.eq.s32.totalorder %s26, 0
      %p179 = por %p177, %p178
      %s181 = sadd.s32 %s180, 1
      %p184 = scmp.eq.s32.totalorder %s20, 1
      %p185 = scmp.ne.s32.totalorder %s180, %s182
      %p186 = scmp.eq.s32.totalorder %s20, 0
      %p187 = por %p185, %p186
      %p188 = scmp.ne.s32.totalorder %s180, %s182
      %p189 = scmp.eq.s32.totalorder %s25, 1
      %p190 = por %p188, %p189
      %p191 = scmp.ne.s32.totalorder %s182, %s183
      %p192 = scmp.eq.s32.totalorder %s25, 0
      %p193 = por %p191, %p192
      %p194 = scmp.ne.s32.totalorder %s182, %s183
      %p195 = scmp.eq.s32.totalorder %s26, 1
      %p196 = por %p194, %p195
      %p198 = scmp.ne.s32.totalorder %s183, %s197
      %p199 = scmp.eq.s32.totalorder %s26, 0
      %p200 = por %p198, %p199
      %s202 = sadd.s32 %s201, 1
      %p205 = scmp.eq.s32.totalorder %s20, 1
      %p206 = scmp.ne.s32.totalorder %s201, %s203
      %p207 = scmp.eq.s32.totalorder %s20, 0
      %p208 = por %p206, %p207
      %p209 = scmp.ne.s32.totalorder %s201, %s203
      %p210 = scmp.eq.s32.totalorder %s25, 1
      %p211 = por %p209, %p210
      %p212 = scmp.ne.s32.totalorder %s203, %s204
      %p213 = scmp.eq.s32.totalorder %s25, 0
      %p214 = por %p212, %p213
      %p215 = scmp.ne.s32.totalorder %s203, %s204
      %p216 = scmp.eq.s32.totalorder %s26, 1
      %p217 = por %p215, %p216
      %p219 = scmp.ne.s32.totalorder %s204, %s218
      %p220 = scmp.eq.s32.totalorder %s26, 0
      %p221 = por %p219, %p220
      %s223 = sadd.s32 %s222, 1
      %p226 = scmp.eq.s32.totalorder %s20, 1
      %p227 = scmp.ne.s32.totalorder %s222, %s224
      %p228 = scmp.eq.s32.totalorder %s20, 0
      %p229 = por %p227, %p228
      %p230 = scmp.ne.s32.totalorder %s222, %s224
      %p231 = scmp.eq.s32.totalorder %s25, 1
      %p232 = por %p230, %p231
      %p233 = scmp.ne.s32.totalorder %s224, %s225
      %p234 = scmp.eq.s32.totalorder %s25, 0
      %p235 = por %p233, %p234
      %p236 = scmp.ne.s32.totalorder %s224, %s225
      %p237 = scmp.eq.s32.totalorder %s26, 1
      %p238 = por %p236, %p237
      %p240 = scmp.ne.s32.totalorder %s225, %s239
      %p241 = scmp.eq.s32.totalorder %s26, 0
      %p242 = por %p240, %p241
      %s244 = sadd.s32 %s243, 1
      %p247 = scmp.eq.s32.totalorder %s20, 1
      %p248 = scmp.ne.s32.totalorder %s243, %s245
      %p249 = scmp.eq.s32.totalorder %s20, 0
      %p250 = por %p248, %p249
      %p251 = scmp.ne.s32.totalorder %s243, %s245
      %p252 = scmp.eq.s32.totalorder %s25, 1
      %p253 = por %p251, %p252
      %p254 = scmp.ne.s32.totalorder %s245, %s246
      %p255 = scmp.eq.s32.totalorder %s25, 0
      %p256 = por %p254, %p255
      %p257 = scmp.ne.s32.totalorder %s245, %s246
      %p258 = scmp.eq.s32.totalorder %s26, 1
      %p259 = por %p257, %p258
      %p261 = scmp.ne.s32.totalorder %s246, %s260
      %p262 = scmp.eq.s32.totalorder %s26, 0
      %p263 = por %p261, %p262
      %s264 = ssub.s32 %s20, %s27
      %p265 = scmp.eq.s32.totalorder %s264, 0
      %s267 = sadd.s32 %s266, 1
      %s268 = scalar_select %p265, %s266, %s267
      %p271 = pneg %p265
      %p272 = scmp.eq.s32.totalorder %s20, 1
      %p273 = por %p271, %p272
      %p274 = scmp.ne.s32.totalorder %s266, %s269
      %p275 = scmp.eq.s32.totalorder %s20, 0
      %p276 = por %p274, %p275
      %p277 = scmp.ne.s32.totalorder %s266, %s269
      %p278 = scmp.eq.s32.totalorder %s25, 1
      %p279 = por %p277, %p278
      %p280 = scmp.ne.s32.totalorder %s269, %s270
      %p281 = scmp.eq.s32.totalorder %s25, 0
      %p282 = por %p280, %p281
      %p283 = scmp.ne.s32.totalorder %s269, %s270
      %p284 = scmp.eq.s32.totalorder %s26, 1
      %p285 = por %p283, %p284
      %p287 = scmp.ne.s32.totalorder %s270, %s286
      %p288 = scmp.eq.s32.totalorder %s26, 0
      %p289 = por %p287, %p288
      %p290 = scmp.le.s32.totalorder 1, %s20
      %p291 = scmp.lt.s32.totalorder %s20, 3
      %p292 = pnand %p290, %p291
      %p293 = pneg %p292
      // Predicated region
      $region9: #{tpu_custom_call.1} parent=5 // pred_check
        _
      $region10: #{tpu_custom_call.1} parent=5 // pred_check_branch
        %295 = sbr.rel (%p292) target = $region12
      $region11: #{tpu_custom_call.1} parent=5 // pred_region
        %s296 = ssub.s32 %s20, 1
        // Predicated region
        $region13: #{tpu_custom_call.1} parent=11 // pred_check
          %p297 = pneg %p67
        $region14: #{tpu_custom_call.1} parent=11 // pred_check_branch
          %299 = sbr.rel (%p297) target = $region16
        $region15: #{tpu_custom_call.1} parent=11 // pred_region
          _
        $region16: #{tpu_custom_call.1} parent=11 // pred_fallthru
          _
        // Predicated region
        $region17: #{tpu_custom_call.1} parent=11 // pred_check
          %p300 = pneg %p88
        $region18: #{tpu_custom_call.1} parent=11 // pred_check_branch
          %302 = sbr.rel (%p300) target = $region20
        $region19: #{tpu_custom_call.1} parent=11 // pred_region
          _
        $region20: #{tpu_custom_call.1} parent=11 // pred_fallthru
          _
        // Predicated region
        $region21: #{tpu_custom_call.1} parent=11 // pred_check
          %p303 = pneg %p109
        $region22: #{tpu_custom_call.1} parent=11 // pred_check_branch
          %305 = sbr.rel (%p303) target = $region24
        $region23: #{tpu_custom_call.1} parent=11 // pred_region
          _
        $region24: #{tpu_custom_call.1} parent=11 // pred_fallthru
          _
        // Predicated region
        $region25: #{tpu_custom_call.1} parent=11 // pred_check
          %p306 = pneg %p130
        $region26: #{tpu_custom_call.1} parent=11 // pred_check_branch
          %308 = sbr.rel (%p306) target = $region28
        $region27: #{tpu_custom_call.1} parent=11 // pred_region
          _
        $region28: #{tpu_custom_call.1} parent=11 // pred_fallthru
          _
        // Predicated region
        $region29: #{tpu_custom_call.1} parent=11 // pred_check
          %p309 = pneg %p151
        $region30: #{tpu_custom_call.1} parent=11 // pred_check_branch
          %311 = sbr.rel (%p309) target = $region32
        $region31: #{tpu_custom_call.1} parent=11 // pred_region
          _
        $region32: #{tpu_custom_call.1} parent=11 // pred_fallthru
          _
        // Predicated region
        $region33: #{tpu_custom_call.1} parent=11 // pred_check
          %p312 = pneg %p172
        $region34: #{tpu_custom_call.1} parent=11 // pred_check_branch
          %314 = sbr.rel (%p312) target = $region36
        $region35: #{tpu_custom_call.1} parent=11 // pred_region
          _
        $region36: #{tpu_custom_call.1} parent=11 // pred_fallthru
          _
        // Predicated region
        $region37: #{tpu_custom_call.1} parent=11 // pred_check
          %p315 = pneg %p193
        $region38: #{tpu_custom_call.1} parent=11 // pred_check_branch
          %317 = sbr.rel (%p315) target = $region40
        $region39: #{tpu_custom_call.1} parent=11 // pred_region
          _
        $region40: #{tpu_custom_call.1} parent=11 // pred_fallthru
          _
        // Predicated region
        $region41: #{tpu_custom_call.1} parent=11 // pred_check
          %p318 = pneg %p214
        $region42: #{tpu_custom_call.1} parent=11 // pred_check_branch
          %320 = sbr.rel (%p318) target = $region44
        $region43: #{tpu_custom_call.1} parent=11 // pred_region
          _
        $region44: #{tpu_custom_call.1} parent=11 // pred_fallthru
          _
        // Predicated region
        $region45: #{tpu_custom_call.1} parent=11 // pred_check
          %p321 = pneg %p235
        $region46: #{tpu_custom_call.1} parent=11 // pred_check_branch
          %323 = sbr.rel (%p321) target = $region48
        $region47: #{tpu_custom_call.1} parent=11 // pred_region
          _
        $region48: #{tpu_custom_call.1} parent=11 // pred_fallthru
          _
        // Predicated region
        $region49: #{tpu_custom_call.1} parent=11 // pred_check
          %p324 = pneg %p256
        $region50: #{tpu_custom_call.1} parent=11 // pred_check_branch
          %326 = sbr.rel (%p324) target = $region52
        $region51: #{tpu_custom_call.1} parent=11 // pred_region
          _
        $region52: #{tpu_custom_call.1} parent=11 // pred_fallthru
          _
      $region12: #{tpu_custom_call.1} parent=5 // pred_fallthru
        _
      %p327 = scmp.lt.s32.totalorder %s20, 2
      // Predicated region
      $region53: #{tpu_custom_call.1} parent=5 // pred_check
        %p328 = pneg %p327
      $region54: #{tpu_custom_call.1} parent=5 // pred_check_branch
        %330 = sbr.rel (%p328) target = $region56
      $region55: #{tpu_custom_call.1} parent=5 // pred_region
        // Predicated region
        $region57: #{tpu_custom_call.1} parent=55 // pred_check
          %p331 = pneg %p40
        $region58: #{tpu_custom_call.1} parent=55 // pred_check_branch
          %333 = sbr.rel (%p331) target = $region60
        $region59: #{tpu_custom_call.1} parent=55 // pred_region
          %p334 = scmp.lt.s32.totalorder %s20, 1
          %s335 = scalar_select %p334, %s20, 1
          %s336 = smul.addr %s335, 2
          %s337 = smul.addr %s336, 4
          %s338 = scalar_lea.vmem %s0, %s337
        $region60: #{tpu_custom_call.1} parent=55 // pred_fallthru
          _
      $region56: #{tpu_custom_call.1} parent=5 // pred_fallthru
        _
      %p339 = scmp.le.s32.totalorder 1, %s20
      %p340 = scmp.lt.s32.totalorder %s20, 3
      %p341 = pnand %p339, %p340
      %p342 = pneg %p341
      // Predicated region
      $region61: #{tpu_custom_call.1} parent=5 // pred_check
        _
      $region62: #{tpu_custom_call.1} parent=5 // pred_check_branch
        %344 = sbr.rel (%p341) target = $region64
      $region63: #{tpu_custom_call.1} parent=5 // pred_region
        %s345 = ssub.s32 %s20, 1
        %p346 = scmp.lt.s32.totalorder %s25, 1
        %s347 = scalar_select %p346, %s25, 1
        %s348 = smul.addr %s347, 2
        %s349 = smul.addr %s348, 4
        %s350 = scalar_lea.vmem %s0, %s349
        %p351 = pneg %p46
        %p352 = pneg %p43
        %p353 = pneg %p67
        %p354 = pneg %p64
        %p355 = pneg %p88
        %p356 = pneg %p85
        %p357 = pneg %p109
        %p358 = pneg %p106
        %p359 = pneg %p130
        %p360 = pneg %p127
        %p361 = pneg %p151
        %p362 = pneg %p148
        %p363 = pneg %p172
        %p364 = pneg %p169
        %p365 = pneg %p193
        %p366 = pneg %p190
        %p367 = pneg %p214
        %p368 = pneg %p211
        %p369 = pneg %p235
        %p370 = pneg %p232
        %p371 = pneg %p256
        %p372 = pneg %p253
        %p373 = pneg %p282
        %p374 = pneg %p279
        %s375 = sand.u32 %s269, 1
        %s376 = scalar_lea.sflag [#allocation5], %s375
        %s377 = sand.u32 %s269, 1
        %s378 = smul.addr %s377, 64
        %s379 = scalar_lea.vmem [#allocation4], %s378
        %p380 = scmp.lt.s32.totalorder %s25, 1
        %s381 = scalar_select %p380, %s25, 1
        %s382 = smul.addr %s381, 2
        %s383 = smul.addr %s382, 4
        %s384 = scalar_lea.vmem %s0, %s383
        %v385 = vld [vmem:[%s384] sm:$0xff]
        %v386 = vld [vmem:[%s1] sm:$0x3]
        %v387 = vld [vmem:[%s2] sm:$0x3]
        %v388 = vld [vmem:[%s3] sm:$0xff]
        %v389 = vld [vmem:[%s3 + $0x8] sm:$0xff]
        %v390 = vld [vmem:[%s3 + $0x10] sm:$0xff]
        %v391 = vld [vmem:[%s4] sm:$0xff]
        %v392 = vld [vmem:[%s4 + $0x8] sm:$0xff]
        %v393 = vld [vmem:[%s4 + $0x10] sm:$0xff]
        %395 = vset.pattern.permute.xlu0 0
        %396 = vperm.xlu0 %395, %v391
        %v397 = vpop.permute.xlu0 %396
        %400 = vset.pattern.permute.xlu0 0
        %401 = vperm.xlu0 %400, %v392
        %v402 = vpop.permute.xlu0 %401
        %405 = vset.pattern.permute.xlu0 0
        %406 = vperm.xlu0 %405, %v393
        %v407 = vpop.permute.xlu0 %406
        %v410 = vcombine.high %v385, %v385
        %vm411 = vcmask 31744
        %v413 = vsel %vm411, %v388, 0
        %v416 = vsel %vm411, %v389, 0
        %v419 = vsel %vm411, %v390, 0
        %vm421 = vcmask 1043456
        %v422 = vsel %vm421, %v385, 0
        %v424 = vsel %vm421, %v410, 0
        %426 = vmatprep.subr.mxu0 %v424
        %427 = vmatpush1.msra.mxu0 %v422
        %428 = vmatprep.subr.mxu0 0.0
        %429 = vmatpush1.msra.mxu0 0.0
        %430 = vmatprep.subr.mxu0 0.0
        %431 = vmatpush1.msra.mxu0 0.0
        %432 = vmatprep.subr.mxu0 0.0
        %433 = vmatpush1.msra.mxu0 0.0
        %434 = vmatprep.subr.mxu0 0.0
        %435 = vmatpush1.msra.mxu0 0.0
        %436 = vmatprep.subr.mxu0 0.0
        %437 = vmatpush1.msra.mxu0 0.0
        %438 = vmatprep.subr.mxu0 0.0
        %439 = vmatpush1.msra.mxu0 0.0
        %440 = vmatprep.subr.mxu0 0.0
        %441 = vmatpush1.msra.mxu0 0.0
        %442 = vmatprep.subr.mxu0 0.0
        %443 = vmatpush1.msra.mxu0 0.0
        %444 = vmatprep.subr.mxu0 0.0
        %445 = vmatpush1.msra.mxu0 0.0
        %446 = vmatprep.subr.mxu0 0.0
        %447 = vmatpush1.msra.mxu0 0.0
        %448 = vmatprep.subr.mxu0 0.0
        %449 = vmatpush1.msra.mxu0 0.0
        %450 = vmatprep.subr.mxu0 0.0
        %451 = vmatpush1.msra.mxu0 0.0
        %452 = vmatprep.subr.mxu0 0.0
        %453 = vmatpush1.msra.mxu0 0.0
        %454 = vmatprep.subr.mxu0 0.0
        %455 = vmatpush1.msra.mxu0 0.0
        %456 = vmatprep.subr.mxu0 0.0
        %457 = vmatpush1.msra.mxu0 0.0
        %458 = vmatprep.subr.mxu0 0.0
        %459 = vmatpush1.msra.mxu0 0.0
        %460 = vmatprep.subr.mxu0 0.0
        %461 = vmatpush1.msra.mxu0 0.0
        %462 = vmatprep.subr.mxu0 0.0
        %463 = vmatpush1.msra.mxu0 0.0
        %464 = vmatprep.subr.mxu0 0.0
        %465 = vmatpush1.msra.mxu0 0.0
        %466 = vmatprep.subr.mxu0 0.0
        %467 = vmatpush1.msra.mxu0 0.0
        %468 = vmatprep.subr.mxu0 0.0
        %469 = vmatpush1.msra.mxu0 0.0
        %470 = vmatprep.subr.mxu0 0.0
        %471 = vmatpush1.msra.mxu0 0.0
        %472 = vmatprep.subr.mxu0 0.0
        %473 = vmatpush1.msra.mxu0 0.0
        %474 = vmatprep.subr.mxu0 0.0
        %475 = vmatpush1.msra.mxu0 0.0
        %476 = vmatprep.subr.mxu0 0.0
        %477 = vmatpush1.msra.mxu0 0.0
        %478 = vmatprep.subr.mxu0 0.0
        %479 = vmatpush1.msra.mxu0 0.0
        %480 = vmatprep.subr.mxu0 0.0
        %481 = vmatpush1.msra.mxu0 0.0
        %482 = vmatprep.subr.mxu0 0.0
        %483 = vmatpush1.msra.mxu0 0.0
        %484 = vmatprep.subr.mxu0 0.0
        %485 = vmatpush1.msra.mxu0 0.0
        %486 = vmatprep.subr.mxu0 0.0
        %487 = vmatpush1.msra.mxu0 0.0
        %488 = vmatprep.subr.mxu0 0.0
        %489 = vmatpush1.msra.mxu0 0.0
        %490 = vmatprep.mubr.f32.mxu0 0.0
        %491 = vmatmul.mubr.f32.gmra.mrb[0].mxu0 %v413
        %v492 = vpop.f32.mrb[0].mxu0
        %v493 = vadd.f32 %v397, %v492
        %v494 = vpop.f32.mrb[0].mxu0
        %v495 = vadd.f32 %v397, %v494
        %496 = vmatprep.mubr.f32.mxu0 0.0
        %497 = vmatmul.mubr.f32.gmra.mrb[0].mxu0 %v416
        %v498 = vpop.f32.mrb[0].mxu0
        %v499 = vadd.f32 %v402, %v498
        %v500 = vpop.f32.mrb[0].mxu0
        %v501 = vadd.f32 %v402, %v500
        %502 = vmatprep.mubr.f32.mxu0 0.0
        %503 = vmatmul.mubr.f32.gmra.mrb[0].mxu0 %v419
        %v504 = vpop.f32.mrb[0].mxu0
        %v505 = vadd.f32 %v407, %v504
        %v506 = vpop.f32.mrb[0].mxu0
        %v507 = vadd.f32 %v407, %v506
        %508 = vdwg.mxu0
        %v509 = vmax.f32 %v493, 0.0
        %v510 = vmax.f32 %v495, 0.0
        %v511 = vmax.f32 %v499, 0.0
        %v512 = vmax.f32 %v501, 0.0
        %v513 = vmax.f32 %v505, 0.0
        %v514 = vmax.f32 %v507, 0.0
        %515 = vst [vmem:[%s379] sm:$0xff] %v509
        %516 = vst [vmem:[%s379 + $0x8] sm:$0xff] %v510
        %517 = vrot.lane.b32.xlu0 %v511, 17
        %v518 = vpop.permute.xlu0 %517
        %519 = vrot.lane.b32.xlu0 %v512, 17
        %v520 = vpop.permute.xlu0 %519
        %v521 = vlaneseq
        %v522 = vand.u32 %v521, 127
        %vm523 = vcmp.lt.s32.totalorder %v522, 17
        %v524 = vsel %vm523, %v518, %v520
        %v525 = vsel %vm523, %v520, %v518
        %vm526 = vcmp.ge.s32.totalorder %v386, 1
        %vm527 = vcmp.ge.s32.totalorder %v387, 1
        %vm528 = vmand %vm526, %vm527
        %v529 = vsel %vm528, 1, 0
        %v530 = vlaneseq
        %v531 = vshrl.u32 %v530, 7
        %v532 = vsub.s32 0, %v531
        %v533 = vrot.slane %v529, %v532
        %v534 = vlaneseq
        %v535 = vshrl.u32 %v534, 7
        %v536 = vsub.s32 1, %v535
        %v537 = vrot.slane %v529, %v536
        %vm538 = vcmp.eq.s32.totalorder %v533, 1
        %vm539 = vcmp.eq.s32.totalorder %v537, 1
        %v540 = vsel %vm538, %v525, 0.0
        %v541 = vsel %vm539, %v524, 0.0
        %542 = vst [vmem:[#allocation2] sm:$0xff] %v540
        %543 = vst [vmem:[#allocation2 + $0x8] sm:$0xff] %v541
        %544 = vrot.lane.b32.xlu0 %v511, 16
        %v545 = vpop.permute.xlu0 %544
        %546 = vrot.lane.b32.xlu0 %v512, 16
        %v547 = vpop.permute.xlu0 %546
        %vm548 = vcmp.lt.s32.totalorder %v522, 16
        %v549 = vsel %vm548, %v545, %v547
        %v550 = vsel %vm548, %v547, %v545
        %v551 = vsel %vm526, 1, 0
        %v552 = vlaneseq
        %v553 = vshrl.u32 %v552, 7
        %v554 = vsub.s32 0, %v553
        %v555 = vrot.slane %v551, %v554
        %v556 = vlaneseq
        %v557 = vshrl.u32 %v556, 7
        %v558 = vsub.s32 1, %v557
        %v559 = vrot.slane %v551, %v558
        %vm560 = vcmp.eq.s32.totalorder %v555, 1
        %vm561 = vcmp.eq.s32.totalorder %v559, 1
        %v562 = vsel %vm560, %v550, 0.0
        %v563 = vsel %vm561, %v549, 0.0
        %564 = vst [vmem:[#allocation2 + $0x10] sm:$0xff] %v562
        %565 = vst [vmem:[#allocation2 + $0x18] sm:$0xff] %v563
        %566 = vrot.lane.b32.xlu0 %v511, 15
        %v567 = vpop.permute.xlu0 %566
        %568 = vrot.lane.b32.xlu0 %v512, 15
        %v569 = vpop.permute.xlu0 %568
        %vm570 = vcmp.lt.s32.totalorder %v522, 15
        %v571 = vsel %vm570, %v567, %v569
        %v572 = vsel %vm570, %v569, %v567
        %vm573 = vcmp.lt.s32.totalorder %v387, 15
        %vm574 = vmand %vm526, %vm573
        %v575 = vsel %vm574, 1, 0
        %v576 = vlaneseq
        %v577 = vshrl.u32 %v576, 7
        %v578 = vsub.s32 0, %v577
        %v579 = vrot.slane %v575, %v578
        %v580 = vlaneseq
        %v581 = vshrl.u32 %v580, 7
        %v582 = vsub.s32 1, %v581
        %v583 = vrot.slane %v575, %v582
        %vm584 = vcmp.eq.s32.totalorder %v579, 1
        %vm585 = vcmp.eq.s32.totalorder %v583, 1
        %v586 = vsel %vm584, %v572, 0.0
        %v587 = vsel %vm585, %v571, 0.0
        %588 = vst [vmem:[#allocation2 + $0x20] sm:$0xff] %v586
        %589 = vst [vmem:[#allocation2 + $0x28] sm:$0xff] %v587
        %590 = vrot.lane.b32.xlu0 %v511, 1
        %v591 = vpop.permute.xlu0 %590
        %592 = vrot.lane.b32.xlu0 %v512, 1
        %v593 = vpop.permute.xlu0 %592
        %vm594 = vcmp.lt.s32.totalorder %v522, 1
        %v595 = vsel %vm594, %v591, %v593
        %v596 = vsel %vm594, %v593, %v591
        %v597 = vsel %vm527, 1, 0
        %v598 = vlaneseq
        %v599 = vshrl.u32 %v598, 7
        %v600 = vsub.s32 0, %v599
        %v601 = vrot.slane %v597, %v600
        %v602 = vlaneseq
        %v603 = vshrl.u32 %v602, 7
        %v604 = vsub.s32 1, %v603
        %v605 = vrot.slane %v597, %v604
        %vm606 = vcmp.eq.s32.totalorder %v601, 1
        %vm607 = vcmp.eq.s32.totalorder %v605, 1
        %v608 = vsel %vm606, %v596, 0.0
        %v609 = vsel %vm607, %v595, 0.0
        %610 = vst [vmem:[#allocation2 + $0x30] sm:$0xff] %v608
        %611 = vst [vmem:[#allocation2 + $0x38] sm:$0xff] %v609
        %612 = vst [vmem:[#allocation2 + $0x40] sm:$0xff] %v511
        %613 = vst [vmem:[#allocation2 + $0x48] sm:$0xff] %v512
        %614 = vrot.lane.b32.xlu0 %v511, 127
        %v615 = vpop.permute.xlu0 %614
        %616 = vrot.lane.b32.xlu0 %v512, 127
        %v617 = vpop.permute.xlu0 %616
        %vm618 = vcmp.lt.s32.totalorder %v522, 127
        %v619 = vsel %vm618, %v615, %v617
        %v620 = vsel %vm618, %v617, %v615
        %v621 = vsel %vm573, 1, 0
        %v622 = vlaneseq
        %v623 = vshrl.u32 %v622, 7
        %v624 = vsub.s32 0, %v623
        %v625 = vrot.slane %v621, %v624
        %v626 = vlaneseq
        %v627 = vshrl.u32 %v626, 7
        %v628 = vsub.s32 1, %v627
        %v629 = vrot.slane %v621, %v628
        %vm630 = vcmp.eq.s32.totalorder %v625, 1
        %vm631 = vcmp.eq.s32.totalorder %v629, 1
        %v632 = vsel %vm630, %v619, 0.0
        %v633 = vsel %vm631, %v620, 0.0
        %634 = vst [vmem:[#allocation2 + $0x50] sm:$0xff] %v632
        %635 = vst [vmem:[#allocation2 + $0x58] sm:$0xff] %v633
        %636 = vrot.lane.b32.xlu0 %v511, 113
        %v637 = vpop.permute.xlu0 %636
        %638 = vrot.lane.b32.xlu0 %v512, 113
        %v639 = vpop.permute.xlu0 %638
        %vm640 = vcmp.lt.s32.totalorder %v522, 113
        %v641 = vsel %vm640, %v637, %v639
        %v642 = vsel %vm640, %v639, %v637
        %vm643 = vcmp.lt.s32.totalorder %v386, 15
        %vm644 = vmand %vm643, %vm527
        %v645 = vsel %vm644, 1, 0
        %v646 = vlaneseq
        %v647 = vshrl.u32 %v646, 7
        %v648 = vsub.s32 0, %v647
        %v649 = vrot.slane %v645, %v648
        %v650 = vlaneseq
        %v651 = vshrl.u32 %v650, 7
        %v652 = vsub.s32 1, %v651
        %v653 = vrot.slane %v645, %v652
        %vm654 = vcmp.eq.s32.totalorder %v649, 1
        %vm655 = vcmp.eq.s32.totalorder %v653, 1
        %v656 = vsel %vm654, %v641, 0.0
        %v657 = vsel %vm655, %v642, 0.0
        %658 = vst [vmem:[#allocation2 + $0x60] sm:$0xff] %v656
        %659 = vst [vmem:[#allocation2 + $0x68] sm:$0xff] %v657
        %660 = vrot.lane.b32.xlu0 %v511, 112
        %v661 = vpop.permute.xlu0 %660
        %662 = vrot.lane.b32.xlu0 %v512, 112
        %v663 = vpop.permute.xlu0 %662
        %vm664 = vcmp.lt.s32.totalorder %v522, 112
        %v665 = vsel %vm664, %v661, %v663
        %v666 = vsel %vm664, %v663, %v661
        %v667 = vsel %vm643, 1, 0
        %v668 = vlaneseq
        %v669 = vshrl.u32 %v668, 7
        %v670 = vsub.s32 0, %v669
        %v671 = vrot.slane %v667, %v670
        %v672 = vlaneseq
        %v673 = vshrl.u32 %v672, 7
        %v674 = vsub.s32 1, %v673
        %v675 = vrot.slane %v667, %v674
        %vm676 = vcmp.eq.s32.totalorder %v671, 1
        %vm677 = vcmp.eq.s32.totalorder %v675, 1
        %v678 = vsel %vm676, %v665, 0.0
        %v679 = vsel %vm677, %v666, 0.0
        %680 = vst [vmem:[#allocation2 + $0x70] sm:$0xff] %v678
        %681 = vst [vmem:[#allocation2 + $0x78] sm:$0xff] %v679
        %682 = vrot.lane.b32.xlu0 %v511, 111
        %v683 = vpop.permute.xlu0 %682
        %684 = vrot.lane.b32.xlu0 %v512, 111
        %v685 = vpop.permute.xlu0 %684
        %vm686 = vcmp.lt.s32.totalorder %v522, 111
        %v687 = vsel %vm686, %v683, %v685
        %v688 = vsel %vm686, %v685, %v683
        %vm689 = vmand %vm643, %vm573
        %v690 = vsel %vm689, 1, 0
        %v691 = vlaneseq
        %v692 = vshrl.u32 %v691, 7
        %v693 = vsub.s32 0, %v692
        %v694 = vrot.slane %v690, %v693
        %v695 = vlaneseq
        %v696 = vshrl.u32 %v695, 7
        %v697 = vsub.s32 1, %v696
        %v698 = vrot.slane %v690, %v697
        %vm699 = vcmp.eq.s32.totalorder %v694, 1
        %vm700 = vcmp.eq.s32.totalorder %v698, 1
        %v701 = vsel %vm699, %v687, 0.0
        %v702 = vsel %vm700, %v688, 0.0
        %703 = vst [vmem:[#allocation2 + $0x80] sm:$0xff] %v701
        %704 = vst [vmem:[#allocation2 + $0x88] sm:$0xff] %v702
        %v705 = vld [vmem:[%s5] sm:$0xff]
        %v706 = vld [vmem:[#allocation2] sm:$0xff]
        %v707 = vld [vmem:[#allocation2 + $0x8] sm:$0xff]
        %v708 = vld [vmem:[#allocation2 + $0x10] sm:$0xff]
        %v709 = vld [vmem:[#allocation2 + $0x18] sm:$0xff]
        %v710 = vld [vmem:[#allocation2 + $0x20] sm:$0xff]
        %v711 = vld [vmem:[#allocation2 + $0x28] sm:$0xff]
        %v712 = vld [vmem:[#allocation2 + $0x30] sm:$0xff]
        %v713 = vld [vmem:[#allocation2 + $0x38] sm:$0xff]
        %v714 = vld [vmem:[#allocation2 + $0x40] sm:$0xff]
        %v715 = vld [vmem:[#allocation2 + $0x48] sm:$0xff]
        %v716 = vld [vmem:[#allocation2 + $0x50] sm:$0xff]
        %v717 = vld [vmem:[#allocation2 + $0x58] sm:$0xff]
        %v718 = vld [vmem:[#allocation2 + $0x60] sm:$0xff]
        %v719 = vld [vmem:[#allocation2 + $0x68] sm:$0xff]
        %v720 = vld [vmem:[#allocation2 + $0x70] sm:$0xff]
        %v721 = vld [vmem:[#allocation2 + $0x78] sm:$0xff]
        %v722 = vld [vmem:[#allocation2 + $0x80] sm:$0xff]
        %v723 = vld [vmem:[#allocation2 + $0x88] sm:$0xff]
        %v724 = vld [vmem:[%s6] sm:$0xff]
        %726 = vset.pattern.permute.xlu0 0
        %727 = vperm.xlu0 %726, %v724
        %v728 = vpop.permute.xlu0 %727
        %vm730 = vcmask 588800
        %v732 = vsel %vm730, %v705, 0
        %734 = vmatprep.subr.mxu0 %v707
        %735 = vmatpush1.msra.mxu0 %v706
        %736 = vmatprep.subr.mxu0 %v709
        %737 = vmatpush1.msra.mxu0 %v708
        %738 = vmatprep.subr.mxu0 %v711
        %739 = vmatpush1.msra.mxu0 %v710
        %740 = vmatprep.subr.mxu0 %v713
        %741 = vmatpush1.msra.mxu0 %v712
        %742 = vmatprep.subr.mxu0 %v715
        %743 = vmatpush1.msra.mxu0 %v714
        %744 = vmatprep.subr.mxu0 %v717
        %745 = vmatpush1.msra.mxu0 %v716
        %746 = vmatprep.subr.mxu0 %v719
        %747 = vmatpush1.msra.mxu0 %v718
        %748 = vmatprep.subr.mxu0 %v721
        %749 = vmatpush1.msra.mxu0 %v720
        %750 = vmatprep.subr.mxu0 %v723
        %751 = vmatpush1.msra.mxu0 %v722
        %752 = vmatprep.subr.mxu0 0.0
        %753 = vmatpush1.msra.mxu0 0.0
        %754 = vmatprep.subr.mxu0 0.0
        %755 = vmatpush1.msra.mxu0 0.0
        %756 = vmatprep.subr.mxu0 0.0
        %757 = vmatpush1.msra.mxu0 0.0
        %758 = vmatprep.subr.mxu0 0.0
        %759 = vmatpush1.msra.mxu0 0.0
        %760 = vmatprep.subr.mxu0 0.0
        %761 = vmatpush1.msra.mxu0 0.0
        %762 = vmatprep.subr.mxu0 0.0
        %763 = vmatpush1.msra.mxu0 0.0
        %764 = vmatprep.subr.mxu0 0.0
        %765 = vmatpush1.msra.mxu0 0.0
        %766 = vmatprep.subr.mxu0 0.0
        %767 = vmatpush1.msra.mxu0 0.0
        %768 = vmatprep.subr.mxu0 0.0
        %769 = vmatpush1.msra.mxu0 0.0
        %770 = vmatprep.subr.mxu0 0.0
        %771 = vmatpush1.msra.mxu0 0.0
        %772 = vmatprep.subr.mxu0 0.0
        %773 = vmatpush1.msra.mxu0 0.0
        %774 = vmatprep.subr.mxu0 0.0
        %775 = vmatpush1.msra.mxu0 0.0
        %776 = vmatprep.subr.mxu0 0.0
        %777 = vmatpush1.msra.mxu0 0.0
        %778 = vmatprep.subr.mxu0 0.0
        %779 = vmatpush1.msra.mxu0 0.0
        %780 = vmatprep.subr.mxu0 0.0
        %781 = vmatpush1.msra.mxu0 0.0
        %782 = vmatprep.subr.mxu0 0.0
        %783 = vmatpush1.msra.mxu0 0.0
        %784 = vmatprep.subr.mxu0 0.0
        %785 = vmatpush1.msra.mxu0 0.0
        %786 = vmatprep.subr.mxu0 0.0
        %787 = vmatpush1.msra.mxu0 0.0
        %788 = vmatprep.subr.mxu0 0.0
        %789 = vmatpush1.msra.mxu0 0.0
        %790 = vmatprep.subr.mxu0 0.0
        %791 = vmatpush1.msra.mxu0 0.0
        %792 = vmatprep.subr.mxu0 0.0
        %793 = vmatpush1.msra.mxu0 0.0
        %794 = vmatprep.subr.mxu0 0.0
        %795 = vmatpush1.msra.mxu0 0.0
        %796 = vmatprep.subr.mxu0 0.0
        %797 = vmatpush1.msra.mxu0 0.0
        %798 = vmatprep.mubr.f32.mxu0 0.0
        %799 = vmatmul.mubr.f32.gmra.mrb[0].mxu0 %v732
        %v800 = vpop.f32.mrb[0].mxu0
        %v801 = vadd.f32 %v728, %v800
        %v802 = vpop.f32.mrb[0].mxu0
        %v803 = vadd.f32 %v728, %v802
        %804 = vdwg.mxu0
        %v805 = vmax.f32 %v801, 0.0
        %v806 = vmax.f32 %v803, 0.0
        %807 = vst [vmem:[%s379 + $0x10] sm:$0xff] %v805
        %808 = vst [vmem:[%s379 + $0x18] sm:$0xff] %v806
        %809 = vrot.lane.b32.xlu0 %v513, 34
        %v810 = vpop.permute.xlu0 %809
        %811 = vrot.lane.b32.xlu0 %v514, 34
        %v812 = vpop.permute.xlu0 %811
        %vm813 = vcmp.lt.s32.totalorder %v522, 34
        %v814 = vsel %vm813, %v810, %v812
        %v815 = vsel %vm813, %v812, %v810
        %vm816 = vcmp.ge.s32.totalorder %v386, 2
        %vm817 = vcmp.ge.s32.totalorder %v387, 2
        %vm818 = vmand %vm816, %vm817
        %v819 = vsel %vm818, 1, 0
        %v820 = vlaneseq
        %v821 = vshrl.u32 %v820, 7
        %v822 = vsub.s32 0, %v821
        %v823 = vrot.slane %v819, %v822
        %v824 = vlaneseq
        %v825 = vshrl.u32 %v824, 7
        %v826 = vsub.s32 1, %v825
        %v827 = vrot.slane %v819, %v826
        %vm828 = vcmp.eq.s32.totalorder %v823, 1
        %vm829 = vcmp.eq.s32.totalorder %v827, 1
        %v830 = vsel %vm828, %v815, 0.0
        %v831 = vsel %vm829, %v814, 0.0
        %832 = vst [vmem:[#allocation3] sm:$0xff] %v830
        %833 = vst [vmem:[#allocation3 + $0x8] sm:$0xff] %v831
        %834 = vrot.lane.b32.xlu0 %v513, 33
        %v835 = vpop.permute.xlu0 %834
        %836 = vrot.lane.b32.xlu0 %v514, 33
        %v837 = vpop.permute.xlu0 %836
        %vm838 = vcmp.lt.s32.totalorder %v522, 33
        %v839 = vsel %vm838, %v835, %v837
        %v840 = vsel %vm838, %v837, %v835
        %vm841 = vmand %vm816, %vm527
        %v842 = vsel %vm841, 1, 0
        %v843 = vlaneseq
        %v844 = vshrl.u32 %v843, 7
        %v845 = vsub.s32 0, %v844
        %v846 = vrot.slane %v842, %v845
        %v847 = vlaneseq
        %v848 = vshrl.u32 %v847, 7
        %v849 = vsub.s32 1, %v848
        %v850 = vrot.slane %v842, %v849
        %vm851 = vcmp.eq.s32.totalorder %v846, 1
        %vm852 = vcmp.eq.s32.totalorder %v850, 1
        %v853 = vsel %vm851, %v840, 0.0
        %v854 = vsel %vm852, %v839, 0.0
        %855 = vst [vmem:[#allocation3 + $0x10] sm:$0xff] %v853
        %856 = vst [vmem:[#allocation3 + $0x18] sm:$0xff] %v854
        %857 = vrot.lane.b32.xlu0 %v513, 32
        %v858 = vpop.permute.xlu0 %857
        %859 = vrot.lane.b32.xlu0 %v514, 32
        %v860 = vpop.permute.xlu0 %859
        %vm861 = vcmp.lt.s32.totalorder %v522, 32
        %v862 = vsel %vm861, %v858, %v860
        %v863 = vsel %vm861, %v860, %v858
        %v864 = vsel %vm816, 1, 0
        %v865 = vlaneseq
        %v866 = vshrl.u32 %v865, 7
        %v867 = vsub.s32 0, %v866
        %v868 = vrot.slane %v864, %v867
        %v869 = vlaneseq
        %v870 = vshrl.u32 %v869, 7
        %v871 = vsub.s32 1, %v870
        %v872 = vrot.slane %v864, %v871
        %vm873 = vcmp.eq.s32.totalorder %v868, 1
        %vm874 = vcmp.eq.s32.totalorder %v872, 1
        %v875 = vsel %vm873, %v863, 0.0
        %v876 = vsel %vm874, %v862, 0.0
        %877 = vst [vmem:[#allocation3 + $0x20] sm:$0xff] %v875
        %878 = vst [vmem:[#allocation3 + $0x28] sm:$0xff] %v876
        %879 = vrot.lane.b32.xlu0 %v513, 31
        %v880 = vpop.permute.xlu0 %879
        %881 = vrot.lane.b32.xlu0 %v514, 31
        %v882 = vpop.permute.xlu0 %881
        %vm883 = vcmp.lt.s32.totalorder %v522, 31
        %v884 = vsel %vm883, %v880, %v882
        %v885 = vsel %vm883, %v882, %v880
        %vm886 = vmand %vm816, %vm573
        %v887 = vsel %vm886, 1, 0
        %v888 = vlaneseq
        %v889 = vshrl.u32 %v888, 7
        %v890 = vsub.s32 0, %v889
        %v891 = vrot.slane %v887, %v890
        %v892 = vlaneseq
        %v893 = vshrl.u32 %v892, 7
        %v894 = vsub.s32 1, %v893
        %v895 = vrot.slane %v887, %v894
        %vm896 = vcmp.eq.s32.totalorder %v891, 1
        %vm897 = vcmp.eq.s32.totalorder %v895, 1
        %v898 = vsel %vm896, %v885, 0.0
        %v899 = vsel %vm897, %v884, 0.0
        %900 = vst [vmem:[#allocation3 + $0x30] sm:$0xff] %v898
        %901 = vst [vmem:[#allocation3 + $0x38] sm:$0xff] %v899
        %902 = vrot.lane.b32.xlu0 %v513, 30
        %v903 = vpop.permute.xlu0 %902
        %904 = vrot.lane.b32.xlu0 %v514, 30
        %v905 = vpop.permute.xlu0 %904
        %vm906 = vcmp.lt.s32.totalorder %v522, 30
        %v907 = vsel %vm906, %v903, %v905
        %v908 = vsel %vm906, %v905, %v903
        %vm909 = vcmp.lt.s32.totalorder %v387, 14
        %vm910 = vmand %vm816, %vm909
        %v911 = vsel %vm910, 1, 0
        %v912 = vlaneseq
        %v913 = vshrl.u32 %v912, 7
        %v914 = vsub.s32 0, %v913
        %v915 = vrot.slane %v911, %v914
        %v916 = vlaneseq
        %v917 = vshrl.u32 %v916, 7
        %v918 = vsub.s32 1, %v917
        %v919 = vrot.slane %v911, %v918
        %vm920 = vcmp.eq.s32.totalorder %v915, 1
        %vm921 = vcmp.eq.s32.totalorder %v919, 1
        %v922 = vsel %vm920, %v908, 0.0
        %v923 = vsel %vm921, %v907, 0.0
        %924 = vst [vmem:[#allocation3 + $0x40] sm:$0xff] %v922
        %925 = vst [vmem:[#allocation3 + $0x48] sm:$0xff] %v923
        %926 = vrot.lane.b32.xlu0 %v513, 18
        %v927 = vpop.permute.xlu0 %926
        %928 = vrot.lane.b32.xlu0 %v514, 18
        %v929 = vpop.permute.xlu0 %928
        %vm930 = vcmp.lt.s32.totalorder %v522, 18
        %v931 = vsel %vm930, %v927, %v929
        %v932 = vsel %vm930, %v929, %v927
        %vm933 = vmand %vm526, %vm817
        %v934 = vsel %vm933, 1, 0
        %v935 = vlaneseq
        %v936 = vshrl.u32 %v935, 7
        %v937 = vsub.s32 0, %v936
        %v938 = vrot.slane %v934, %v937
        %v939 = vlaneseq
        %v940 = vshrl.u32 %v939, 7
        %v941 = vsub.s32 1, %v940
        %v942 = vrot.slane %v934, %v941
        %vm943 = vcmp.eq.s32.totalorder %v938, 1
        %vm944 = vcmp.eq.s32.totalorder %v942, 1
        %v945 = vsel %vm943, %v932, 0.0
        %v946 = vsel %vm944, %v931, 0.0
        %947 = vst [vmem:[#allocation3 + $0x50] sm:$0xff] %v945
        %948 = vst [vmem:[#allocation3 + $0x58] sm:$0xff] %v946
        %949 = vrot.lane.b32.xlu0 %v513, 17
        %v950 = vpop.permute.xlu0 %949
        %951 = vrot.lane.b32.xlu0 %v514, 17
        %v952 = vpop.permute.xlu0 %951
        %v953 = vsel %vm523, %v950, %v952
        %v954 = vsel %vm523, %v952, %v950
        %v955 = vsel %vm538, %v954, 0.0
        %v956 = vsel %vm539, %v953, 0.0
        %957 = vst [vmem:[#allocation3 + $0x60] sm:$0xff] %v955
        %958 = vst [vmem:[#allocation3 + $0x68] sm:$0xff] %v956
        %959 = vrot.lane.b32.xlu0 %v513, 16
        %v960 = vpop.permute.xlu0 %959
        %961 = vrot.lane.b32.xlu0 %v514, 16
        %v962 = vpop.permute.xlu0 %961
        %v963 = vsel %vm548, %v960, %v962
        %v964 = vsel %vm548, %v962, %v960
        %v965 = vsel %vm560, %v964, 0.0
        %v966 = vsel %vm561, %v963, 0.0
        %967 = vst [vmem:[#allocation3 + $0x70] sm:$0xff] %v965
        %968 = vst [vmem:[#allocation3 + $0x78] sm:$0xff] %v966
        %969 = vrot.lane.b32.xlu0 %v513, 15
        %v970 = vpop.permute.xlu0 %969
        %971 = vrot.lane.b32.xlu0 %v514, 15
        %v972 = vpop.permute.xlu0 %971
        %v973 = vsel %vm570, %v970, %v972
        %v974 = vsel %vm570, %v972, %v970
        %v975 = vsel %vm584, %v974, 0.0
        %v976 = vsel %vm585, %v973, 0.0
        %977 = vst [vmem:[#allocation3 + $0x80] sm:$0xff] %v975
        %978 = vst [vmem:[#allocation3 + $0x88] sm:$0xff] %v976
        %979 = vrot.lane.b32.xlu0 %v513, 14
        %v980 = vpop.permute.xlu0 %979
        %981 = vrot.lane.b32.xlu0 %v514, 14
        %v982 = vpop.permute.xlu0 %981
        %vm983 = vcmp.lt.s32.totalorder %v522, 14
        %v984 = vsel %vm983, %v980, %v982
        %v985 = vsel %vm983, %v982, %v980
        %vm986 = vmand %vm526, %vm909
        %v987 = vsel %vm986, 1, 0
        %v988 = vlaneseq
        %v989 = vshrl.u32 %v988, 7
        %v990 = vsub.s32 0, %v989
        %v991 = vrot.slane %v987, %v990
        %v992 = vlaneseq
        %v993 = vshrl.u32 %v992, 7
        %v994 = vsub.s32 1, %v993
        %v995 = vrot.slane %v987, %v994
        %vm996 = vcmp.eq.s32.totalorder %v991, 1
        %vm997 = vcmp.eq.s32.totalorder %v995, 1
        %v998 = vsel %vm996, %v985, 0.0
        %v999 = vsel %vm997, %v984, 0.0
        %1000 = vst [vmem:[#allocation3 + $0x90] sm:$0xff] %v998
        %1001 = vst [vmem:[#allocation3 + $0x98] sm:$0xff] %v999
        %1002 = vrot.lane.b32.xlu0 %v513, 2
        %v1003 = vpop.permute.xlu0 %1002
        %1004 = vrot.lane.b32.xlu0 %v514, 2
        %v1005 = vpop.permute.xlu0 %1004
        %vm1006 = vcmp.lt.s32.totalorder %v522, 2
        %v1007 = vsel %vm1006, %v1003, %v1005
        %v1008 = vsel %vm1006, %v1005, %v1003
        %v1009 = vsel %vm817, 1, 0
        %v1010 = vlaneseq
        %v1011 = vshrl.u32 %v1010, 7
        %v1012 = vsub.s32 0, %v1011
        %v1013 = vrot.slane %v1009, %v1012
        %v1014 = vlaneseq
        %v1015 = vshrl.u32 %v1014, 7
        %v1016 = vsub.s32 1, %v1015
        %v1017 = vrot.slane %v1009, %v1016
        %vm1018 = vcmp.eq.s32.totalorder %v1013, 1
        %vm1019 = vcmp.eq.s32.totalorder %v1017, 1
        %v1020 = vsel %vm1018, %v1008, 0.0
        %v1021 = vsel %vm1019, %v1007, 0.0
        %1022 = vst [vmem:[#allocation3 + $0xa0] sm:$0xff] %v1020
        %1023 = vst [vmem:[#allocation3 + $0xa8] sm:$0xff] %v1021
        %1024 = vrot.lane.b32.xlu0 %v513, 1
        %v1025 = vpop.permute.xlu0 %1024
        %1026 = vrot.lane.b32.xlu0 %v514, 1
        %v1027 = vpop.permute.xlu0 %1026
        %v1028 = vsel %vm594, %v1025, %v1027
        %v1029 = vsel %vm594, %v1027, %v1025
        %v1030 = vsel %vm606, %v1029, 0.0
        %v1031 = vsel %vm607, %v1028, 0.0
        %1032 = vst [vmem:[#allocation3 + $0xb0] sm:$0xff] %v1030
        %1033 = vst [vmem:[#allocation3 + $0xb8] sm:$0xff] %v1031
        %1034 = vst [vmem:[#allocation3 + $0xc0] sm:$0xff] %v513
        %1035 = vst [vmem:[#allocation3 + $0xc8] sm:$0xff] %v514
        %1036 = vrot.lane.b32.xlu0 %v513, 127
        %v1037 = vpop.permute.xlu0 %1036
        %1038 = vrot.lane.b32.xlu0 %v514, 127
        %v1039 = vpop.permute.xlu0 %1038
        %v1040 = vsel %vm618, %v1037, %v1039
        %v1041 = vsel %vm618, %v1039, %v1037
        %v1042 = vsel %vm630, %v1040, 0.0
        %v1043 = vsel %vm631, %v1041, 0.0
        %1044 = vst [vmem:[#allocation3 + $0xd0] sm:$0xff] %v1042
        %1045 = vst [vmem:[#allocation3 + $0xd8] sm:$0xff] %v1043
        %1046 = vrot.lane.b32.xlu0 %v513, 126
        %v1047 = vpop.permute.xlu0 %1046
        %1048 = vrot.lane.b32.xlu0 %v514, 126
        %v1049 = vpop.permute.xlu0 %1048
        %vm1050 = vcmp.lt.s32.totalorder %v522, 126
        %v1051 = vsel %vm1050, %v1047, %v1049
        %v1052 = vsel %vm1050, %v1049, %v1047
        %v1053 = vsel %vm909, 1, 0
        %v1054 = vlaneseq
        %v1055 = vshrl.u32 %v1054, 7
        %v1056 = vsub.s32 0, %v1055
        %v1057 = vrot.slane %v1053, %v1056
        %v1058 = vlaneseq
        %v1059 = vshrl.u32 %v1058, 7
        %v1060 = vsub.s32 1, %v1059
        %v1061 = vrot.slane %v1053, %v1060
        %vm1062 = vcmp.eq.s32.totalorder %v1057, 1
        %vm1063 = vcmp.eq.s32.totalorder %v1061, 1
        %v1064 = vsel %vm1062, %v1051, 0.0
        %v1065 = vsel %vm1063, %v1052, 0.0
        %1066 = vst [vmem:[#allocation3 + $0xe0] sm:$0xff] %v1064
        %1067 = vst [vmem:[#allocation3 + $0xe8] sm:$0xff] %v1065
        %1068 = vrot.lane.b32.xlu0 %v513, 114
        %v1069 = vpop.permute.xlu0 %1068
        %1070 = vrot.lane.b32.xlu0 %v514, 114
        %v1071 = vpop.permute.xlu0 %1070
        %vm1072 = vcmp.lt.s32.totalorder %v522, 114
        %v1073 = vsel %vm1072, %v1069, %v1071
        %v1074 = vsel %vm1072, %v1071, %v1069
        %vm1075 = vmand %vm643, %vm817
        %v1076 = vsel %vm1075, 1, 0
        %v1077 = vlaneseq
        %v1078 = vshrl.u32 %v1077, 7
        %v1079 = vsub.s32 0, %v1078
        %v1080 = vrot.slane %v1076, %v1079
        %v1081 = vlaneseq
        %v1082 = vshrl.u32 %v1081, 7
        %v1083 = vsub.s32 1, %v1082
        %v1084 = vrot.slane %v1076, %v1083
        %vm1085 = vcmp.eq.s32.totalorder %v1080, 1
        %vm1086 = vcmp.eq.s32.totalorder %v1084, 1
        %v1087 = vsel %vm1085, %v1073, 0.0
        %v1088 = vsel %vm1086, %v1074, 0.0
        %1089 = vst [vmem:[#allocation3 + $0xf0] sm:$0xff] %v1087
        %1090 = vst [vmem:[#allocation3 + $0xf8] sm:$0xff] %v1088
        %1091 = vrot.lane.b32.xlu0 %v513, 113
        %v1092 = vpop.permute.xlu0 %1091
        %1093 = vrot.lane.b32.xlu0 %v514, 113
        %v1094 = vpop.permute.xlu0 %1093
        %v1095 = vsel %vm640, %v1092, %v1094
        %v1096 = vsel %vm640, %v1094, %v1092
        %v1097 = vsel %vm654, %v1095, 0.0
        %v1098 = vsel %vm655, %v1096, 0.0
        %1099 = vst [vmem:[#allocation3 + $0x100] sm:$0xff] %v1097
        %1100 = vst [vmem:[#allocation3 + $0x108] sm:$0xff] %v1098
        %1101 = vrot.lane.b32.xlu0 %v513, 112
        %v1102 = vpop.permute.xlu0 %1101
        %1103 = vrot.lane.b32.xlu0 %v514, 112
        %v1104 = vpop.permute.xlu0 %1103
        %v1105 = vsel %vm664, %v1102, %v1104
        %v1106 = vsel %vm664, %v1104, %v1102
        %v1107 = vsel %vm676, %v1105, 0.0
        %v1108 = vsel %vm677, %v1106, 0.0
        %1109 = vst [vmem:[#allocation3 + $0x110] sm:$0xff] %v1107
        %1110 = vst [vmem:[#allocation3 + $0x118] sm:$0xff] %v1108
        %1111 = vrot.lane.b32.xlu0 %v513, 111
        %v1112 = vpop.permute.xlu0 %1111
        %1113 = vrot.lane.b32.xlu0 %v514, 111
        %v1114 = vpop.permute.xlu0 %1113
        %v1115 = vsel %vm686, %v1112, %v1114
        %v1116 = vsel %vm686, %v1114, %v1112
        %v1117 = vsel %vm699, %v1115, 0.0
        %v1118 = vsel %vm700, %v1116, 0.0
        %1119 = vst [vmem:[#allocation3 + $0x120] sm:$0xff] %v1117
        %1120 = vst [vmem:[#allocation3 + $0x128] sm:$0xff] %v1118
        %1121 = vrot.lane.b32.xlu0 %v513, 110
        %v1122 = vpop.permute.xlu0 %1121
        %1123 = vrot.lane.b32.xlu0 %v514, 110
        %v1124 = vpop.permute.xlu0 %1123
        %vm1125 = vcmp.lt.s32.totalorder %v522, 110
        %v1126 = vsel %vm1125, %v1122, %v1124
        %v1127 = vsel %vm1125, %v1124, %v1122
        %vm1128 = vmand %vm643, %vm909
        %v1129 = vsel %vm1128, 1, 0
        %v1130 = vlaneseq
        %v1131 = vshrl.u32 %v1130, 7
        %v1132 = vsub.s32 0, %v1131
        %v1133 = vrot.slane %v1129, %v1132
        %v1134 = vlaneseq
        %v1135 = vshrl.u32 %v1134, 7
        %v1136 = vsub.s32 1, %v1135
        %v1137 = vrot.slane %v1129, %v1136
        %vm1138 = vcmp.eq.s32.totalorder %v1133, 1
        %vm1139 = vcmp.eq.s32.totalorder %v1137, 1
        %v1140 = vsel %vm1138, %v1126, 0.0
        %v1141 = vsel %vm1139, %v1127, 0.0
        %1142 = vst [vmem:[#allocation3 + $0x130] sm:$0xff] %v1140
        %1143 = vst [vmem:[#allocation3 + $0x138] sm:$0xff] %v1141
        %1144 = vrot.lane.b32.xlu0 %v513, 98
        %v1145 = vpop.permute.xlu0 %1144
        %1146 = vrot.lane.b32.xlu0 %v514, 98
        %v1147 = vpop.permute.xlu0 %1146
        %vm1148 = vcmp.lt.s32.totalorder %v522, 98
        %v1149 = vsel %vm1148, %v1145, %v1147
        %v1150 = vsel %vm1148, %v1147, %v1145
        %vm1151 = vcmp.lt.s32.totalorder %v386, 14
        %vm1152 = vmand %vm1151, %vm817
        %v1153 = vsel %vm1152, 1, 0
        %v1154 = vlaneseq
        %v1155 = vshrl.u32 %v1154, 7
        %v1156 = vsub.s32 0, %v1155
        %v1157 = vrot.slane %v1153, %v1156
        %v1158 = vlaneseq
        %v1159 = vshrl.u32 %v1158, 7
        %v1160 = vsub.s32 1, %v1159
        %v1161 = vrot.slane %v1153, %v1160
        %vm1162 = vcmp.eq.s32.totalorder %v1157, 1
        %vm1163 = vcmp.eq.s32.totalorder %v1161, 1
        %v1164 = vsel %vm1162, %v1149, 0.0
        %v1165 = vsel %vm1163, %v1150, 0.0
        %1166 = vst [vmem:[#allocation3 + $0x140] sm:$0xff] %v1164
        %1167 = vst [vmem:[#allocation3 + $0x148] sm:$0xff] %v1165
        %1168 = vrot.lane.b32.xlu0 %v513, 97
        %v1169 = vpop.permute.xlu0 %1168
        %1170 = vrot.lane.b32.xlu0 %v514, 97
        %v1171 = vpop.permute.xlu0 %1170
        %vm1172 = vcmp.lt.s32.totalorder %v522, 97
        %v1173 = vsel %vm1172, %v1169, %v1171
        %v1174 = vsel %vm1172, %v1171, %v1169
        %vm1175 = vmand %vm1151, %vm527
        %v1176 = vsel %vm1175, 1, 0
        %v1177 = vlaneseq
        %v1178 = vshrl.u32 %v1177, 7
        %v1179 = vsub.s32 0, %v1178
        %v1180 = vrot.slane %v1176, %v1179
        %v1181 = vlaneseq
        %v1182 = vshrl.u32 %v1181, 7
        %v1183 = vsub.s32 1, %v1182
        %v1184 = vrot.slane %v1176, %v1183
        %vm1185 = vcmp.eq.s32.totalorder %v1180, 1
        %vm1186 = vcmp.eq.s32.totalorder %v1184, 1
        %v1187 = vsel %vm1185, %v1173, 0.0
        %v1188 = vsel %vm1186, %v1174, 0.0
        %1189 = vst [vmem:[#allocation3 + $0x150] sm:$0xff] %v1187
        %1190 = vst [vmem:[#allocation3 + $0x158] sm:$0xff] %v1188
        %1191 = vrot.lane.b32.xlu0 %v513, 96
        %v1192 = vpop.permute.xlu0 %1191
        %1193 = vrot.lane.b32.xlu0 %v514, 96
        %v1194 = vpop.permute.xlu0 %1193
        %vm1195 = vcmp.lt.s32.totalorder %v522, 96
        %v1196 = vsel %vm1195, %v1192, %v1194
        %v1197 = vsel %vm1195, %v1194, %v1192
        %v1198 = vsel %vm1151, 1, 0
        %v1199 = vlaneseq
        %v1200 = vshrl.u32 %v1199, 7
        %v1201 = vsub.s32 0, %v1200
        %v1202 = vrot.slane %v1198, %v1201
        %v1203 = vlaneseq
        %v1204 = vshrl.u32 %v1203, 7
        %v1205 = vsub.s32 1, %v1204
        %v1206 = vrot.slane %v1198, %v1205
        %vm1207 = vcmp.eq.s32.totalorder %v1202, 1
        %vm1208 = vcmp.eq.s32.totalorder %v1206, 1
        %v1209 = vsel %vm1207, %v1196, 0.0
        %v1210 = vsel %vm1208, %v1197, 0.0
        %1211 = vst [vmem:[#allocation3 + $0x160] sm:$0xff] %v1209
        %1212 = vst [vmem:[#allocation3 + $0x168] sm:$0xff] %v1210
        %1213 = vrot.lane.b32.xlu0 %v513, 95
        %v1214 = vpop.permute.xlu0 %1213
        %1215 = vrot.lane.b32.xlu0 %v514, 95
        %v1216 = vpop.permute.xlu0 %1215
        %vm1217 = vcmp.lt.s32.totalorder %v522, 95
        %v1218 = vsel %vm1217, %v1214, %v1216
        %v1219 = vsel %vm1217, %v1216, %v1214
        %vm1220 = vmand %vm1151, %vm573
        %v1221 = vsel %vm1220, 1, 0
        %v1222 = vlaneseq
        %v1223 = vshrl.u32 %v1222, 7
        %v1224 = vsub.s32 0, %v1223
        %v1225 = vrot.slane %v1221, %v1224
        %v1226 = vlaneseq
        %v1227 = vshrl.u32 %v1226, 7
        %v1228 = vsub.s32 1, %v1227
        %v1229 = vrot.slane %v1221, %v1228
        %vm1230 = vcmp.eq.s32.totalorder %v1225, 1
        %vm1231 = vcmp.eq.s32.totalorder %v1229, 1
        %v1232 = vsel %vm1230, %v1218, 0.0
        %v1233 = vsel %vm1231, %v1219, 0.0
        %1234 = vst [vmem:[#allocation3 + $0x170] sm:$0xff] %v1232
        %1235 = vst [vmem:[#allocation3 + $0x178] sm:$0xff] %v1233
        %1236 = vrot.lane.b32.xlu0 %v513, 94
        %v1237 = vpop.permute.xlu0 %1236
        %1238 = vrot.lane.b32.xlu0 %v514, 94
        %v1239 = vpop.permute.xlu0 %1238
        %vm1240 = vcmp.lt.s32.totalorder %v522, 94
        %v1241 = vsel %vm1240, %v1237, %v1239
        %v1242 = vsel %vm1240, %v1239, %v1237
        %vm1243 = vmand %vm1151, %vm909
        %v1244 = vsel %vm1243, 1, 0
        %v1245 = vlaneseq
        %v1246 = vshrl.u32 %v1245, 7
        %v1247 = vsub.s32 0, %v1246
        %v1248 = vrot.slane %v1244, %v1247
        %v1249 = vlaneseq
        %v1250 = vshrl.u32 %v1249, 7
        %v1251 = vsub.s32 1, %v1250
        %v1252 = vrot.slane %v1244, %v1251
        %vm1253 = vcmp.eq.s32.totalorder %v1248, 1
        %vm1254 = vcmp.eq.s32.totalorder %v1252, 1
        %v1255 = vsel %vm1253, %v1241, 0.0
        %v1256 = vsel %vm1254, %v1242, 0.0
        %1257 = vst [vmem:[#allocation3 + $0x180] sm:$0xff] %v1255
        %1258 = vst [vmem:[#allocation3 + $0x188] sm:$0xff] %v1256
        %v1259 = vld [vmem:[%s7] sm:$0xff]
        %v1260 = vld [vmem:[%s7 + $0x8] sm:$0xff]
        %v1261 = vld [vmem:[#allocation3] sm:$0xff]
        %v1262 = vld [vmem:[#allocation3 + $0x8] sm:$0xff]
        %v1263 = vld [vmem:[#allocation3 + $0x10] sm:$0xff]
        %v1264 = vld [vmem:[#allocation3 + $0x18] sm:$0xff]
        %v1265 = vld [vmem:[#allocation3 + $0x20] sm:$0xff]
        %v1266 = vld [vmem:[#allocation3 + $0x28] sm:$0xff]
        %v1267 = vld [vmem:[#allocation3 + $0x30] sm:$0xff]
        %v1268 = vld [vmem:[#allocation3 + $0x38] sm:$0xff]
        %v1269 = vld [vmem:[#allocation3 + $0x40] sm:$0xff]
        %v1270 = vld [vmem:[#allocation3 + $0x48] sm:$0xff]
        %v1271 = vld [vmem:[#allocation3 + $0x50] sm:$0xff]
        %v1272 = vld [vmem:[#allocation3 + $0x58] sm:$0xff]
        %v1273 = vld [vmem:[#allocation3 + $0x60] sm:$0xff]
        %v1274 = vld [vmem:[#allocation3 + $0x68] sm:$0xff]
        %v1275 = vld [vmem:[#allocation3 + $0x70] sm:$0xff]
        %v1276 = vld [vmem:[#allocation3 + $0x78] sm:$0xff]
        %v1277 = vld [vmem:[#allocation3 + $0x80] sm:$0xff]
        %v1278 = vld [vmem:[#allocation3 + $0x88] sm:$0xff]
        %v1279 = vld [vmem:[#allocation3 + $0x90] sm:$0xff]
        %v1280 = vld [vmem:[#allocation3 + $0x98] sm:$0xff]
        %v1281 = vld [vmem:[#allocation3 + $0xa0] sm:$0xff]
        %v1282 = vld [vmem:[#allocation3 + $0xa8] sm:$0xff]
        %v1283 = vld [vmem:[#allocation3 + $0xb0] sm:$0xff]
        %v1284 = vld [vmem:[#allocation3 + $0xb8] sm:$0xff]
        %v1285 = vld [vmem:[#allocation3 + $0xc0] sm:$0xff]
        %v1286 = vld [vmem:[#allocation3 + $0xc8] sm:$0xff]
        %v1287 = vld [vmem:[#allocation3 + $0xd0] sm:$0xff]
        %v1288 = vld [vmem:[#allocation3 + $0xd8] sm:$0xff]
        %v1289 = vld [vmem:[#allocation3 + $0xe0] sm:$0xff]
        %v1290 = vld [vmem:[#allocation3 + $0xe8] sm:$0xff]
        %v1291 = vld [vmem:[#allocation3 + $0xf0] sm:$0xff]
        %v1292 = vld [vmem:[#allocation3 + $0xf8] sm:$0xff]
        %v1293 = vld [vmem:[#allocation3 + $0x100] sm:$0xff]
        %v1294 = vld [vmem:[#allocation3 + $0x108] sm:$0xff]
        %v1295 = vld [vmem:[#allocation3 + $0x110] sm:$0xff]
        %v1296 = vld [vmem:[#allocation3 + $0x118] sm:$0xff]
        %v1297 = vld [vmem:[#allocation3 + $0x120] sm:$0xff]
        %v1298 = vld [vmem:[#allocation3 + $0x128] sm:$0xff]
        %v1299 = vld [vmem:[#allocation3 + $0x130] sm:$0xff]
        %v1300 = vld [vmem:[#allocation3 + $0x138] sm:$0xff]
        %v1301 = vld [vmem:[#allocation3 + $0x140] sm:$0xff]
        %v1302 = vld [vmem:[#allocation3 + $0x148] sm:$0xff]
        %v1303 = vld [vmem:[#allocation3 + $0x150] sm:$0xff]
        %v1304 = vld [vmem:[#allocation3 + $0x158] sm:$0xff]
        %v1305 = vld [vmem:[#allocation3 + $0x160] sm:$0xff]
        %v1306 = vld [vmem:[#allocation3 + $0x168] sm:$0xff]
        %v1307 = vld [vmem:[#allocation3 + $0x170] sm:$0xff]
        %v1308 = vld [vmem:[#allocation3 + $0x178] sm:$0xff]
        %v1309 = vld [vmem:[#allocation3 + $0x180] sm:$0xff]
        %v1310 = vld [vmem:[#allocation3 + $0x188] sm:$0xff]
        %v1311 = vld [vmem:[%s8] sm:$0xff]
        %1313 = vset.pattern.permute.xlu0 0
        %1314 = vperm.xlu0 %1313, %v1311
        %v1315 = vpop.permute.xlu0 %1314
        %v1318 = vsel %vm730, %v1260, 0
        %1320 = vmatprep.subr.mxu0 %v1262
        %1321 = vmatpush1.msra.mxu0 %v1261
        %1322 = vmatprep.subr.mxu0 %v1264
        %1323 = vmatpush1.msra.mxu0 %v1263
        %1324 = vmatprep.subr.mxu0 %v1266
        %1325 = vmatpush1.msra.mxu0 %v1265
        %1326 = vmatprep.subr.mxu0 %v1268
        %1327 = vmatpush1.msra.mxu0 %v1267
        %1328 = vmatprep.subr.mxu0 %v1270
        %1329 = vmatpush1.msra.mxu0 %v1269
        %1330 = vmatprep.subr.mxu0 %v1272
        %1331 = vmatpush1.msra.mxu0 %v1271
        %1332 = vmatprep.subr.mxu0 %v1274
        %1333 = vmatpush1.msra.mxu0 %v1273
        %1334 = vmatprep.subr.mxu0 %v1276
        %1335 = vmatpush1.msra.mxu0 %v1275
        %1336 = vmatprep.subr.mxu0 %v1278
        %1337 = vmatpush1.msra.mxu0 %v1277
        %1338 = vmatprep.subr.mxu0 %v1280
        %1339 = vmatpush1.msra.mxu0 %v1279
        %1340 = vmatprep.subr.mxu0 %v1282
        %1341 = vmatpush1.msra.mxu0 %v1281
        %1342 = vmatprep.subr.mxu0 %v1284
        %1343 = vmatpush1.msra.mxu0 %v1283
        %1344 = vmatprep.subr.mxu0 %v1286
        %1345 = vmatpush1.msra.mxu0 %v1285
        %1346 = vmatprep.subr.mxu0 %v1288
        %1347 = vmatpush1.msra.mxu0 %v1287
        %1348 = vmatprep.subr.mxu0 %v1290
        %1349 = vmatpush1.msra.mxu0 %v1289
        %1350 = vmatprep.subr.mxu0 %v1292
        %1351 = vmatpush1.msra.mxu0 %v1291
        %1352 = vmatprep.subr.mxu0 %v1294
        %1353 = vmatpush1.msra.mxu0 %v1293
        %1354 = vmatprep.subr.mxu0 %v1296
        %1355 = vmatpush1.msra.mxu0 %v1295
        %1356 = vmatprep.subr.mxu0 %v1298
        %1357 = vmatpush1.msra.mxu0 %v1297
        %1358 = vmatprep.subr.mxu0 %v1300
        %1359 = vmatpush1.msra.mxu0 %v1299
        %1360 = vmatprep.subr.mxu0 %v1302
        %1361 = vmatpush1.msra.mxu0 %v1301
        %1362 = vmatprep.subr.mxu0 %v1304
        %1363 = vmatpush1.msra.mxu0 %v1303
        %1364 = vmatprep.subr.mxu0 %v1306
        %1365 = vmatpush1.msra.mxu0 %v1305
        %1366 = vmatprep.subr.mxu0 %v1308
        %1367 = vmatpush1.msra.mxu0 %v1307
        %1368 = vmatprep.subr.mxu0 %v1310
        %1369 = vmatpush1.msra.mxu0 %v1309
        %1370 = vmatprep.subr.mxu0 0.0
        %1371 = vmatpush1.msra.mxu0 0.0
        %1372 = vmatprep.subr.mxu0 0.0
        %1373 = vmatpush1.msra.mxu0 0.0
        %1374 = vmatprep.subr.mxu0 0.0
        %1375 = vmatpush1.msra.mxu0 0.0
        %1376 = vmatprep.subr.mxu0 0.0
        %1377 = vmatpush1.msra.mxu0 0.0
        %1378 = vmatprep.subr.mxu0 0.0
        %1379 = vmatpush1.msra.mxu0 0.0
        %1380 = vmatprep.subr.mxu0 0.0
        %1381 = vmatpush1.msra.mxu0 0.0
        %1382 = vmatprep.subr.mxu0 0.0
        %1383 = vmatpush1.msra.mxu0 0.0
        %1384 = vmatprep.mubr.f32.mxu0 %v1318
        %1385 = vmatmul.mubr.f32.gmra.mrb[0].mxu0 %v1259
        %v1386 = vpop.f32.mrb[0].mxu0
        %v1387 = vadd.f32 %v1315, %v1386
        %v1388 = vpop.f32.mrb[0].mxu0
        %v1389 = vadd.f32 %v1315, %v1388
        %1390 = vdwg.mxu0
        %v1391 = vmax.f32 %v1387, 0.0
        %v1392 = vmax.f32 %v1389, 0.0
        %1393 = vst [vmem:[%s379 + $0x20] sm:$0xff] %v1391
        %1394 = vst [vmem:[%s379 + $0x28] sm:$0xff] %v1392
        %1396 = vrot.lane.b32.xlu0 %v385, 16
        %v1397 = vpop.permute.xlu0 %1396
        %1398 = vrot.lane.b32.xlu0 %v410, 16
        %v1399 = vpop.permute.xlu0 %1398
        %v1400 = vsel %vm548, %v1397, %v1399
        %v1401 = vsel %vm548, %v1399, %v1397
        %v1402 = vsel %vm560, %v1401, -inf
        %v1403 = vsel %vm561, %v1400, -inf
        %v1404 = vmax.f32 %v1402, %v385
        %v1405 = vmax.f32 %v1403, %v410
        %1406 = vrot.lane.b32.xlu0 %v385, 112
        %v1407 = vpop.permute.xlu0 %1406
        %1408 = vrot.lane.b32.xlu0 %v410, 112
        %v1409 = vpop.permute.xlu0 %1408
        %v1410 = vsel %vm664, %v1407, %v1409
        %v1411 = vsel %vm664, %v1409, %v1407
        %v1412 = vsel %vm676, %v1410, -inf
        %v1413 = vsel %vm677, %v1411, -inf
        %v1414 = vmax.f32 %v1404, %v1412
        %v1415 = vmax.f32 %v1405, %v1413
        %1416 = vrot.lane.b32.xlu0 %v1414, 1
        %v1417 = vpop.permute.xlu0 %1416
        %1418 = vrot.lane.b32.xlu0 %v1415, 1
        %v1419 = vpop.permute.xlu0 %1418
        %v1420 = vsel %vm594, %v1417, %v1419
        %v1421 = vsel %vm594, %v1419, %v1417
        %v1422 = vsel %vm606, %v1421, -inf
        %v1423 = vsel %vm607, %v1420, -inf
        %v1424 = vmax.f32 %v1422, %v1414
        %v1425 = vmax.f32 %v1423, %v1415
        %1426 = vrot.lane.b32.xlu0 %v1414, 127
        %v1427 = vpop.permute.xlu0 %1426
        %1428 = vrot.lane.b32.xlu0 %v1415, 127
        %v1429 = vpop.permute.xlu0 %1428
        %v1430 = vsel %vm618, %v1427, %v1429
        %v1431 = vsel %vm618, %v1429, %v1427
        %v1432 = vsel %vm630, %v1430, -inf
        %v1433 = vsel %vm631, %v1431, -inf
        %v1434 = vmax.f32 %v1424, %v1432
        %v1435 = vmax.f32 %v1425, %v1433
        %v1436 = vld [vmem:[%s9] sm:$0xff]
        %v1437 = vld [vmem:[%s10] sm:$0xff]
        %1439 = vset.pattern.permute.xlu0 0
        %1440 = vperm.xlu0 %1439, %v1437
        %v1441 = vpop.permute.xlu0 %1440
        %v1444 = vsel %vm411, %v1436, 0
        %v1447 = vsel %vm421, %v1434, 0
        %v1450 = vsel %vm421, %v1435, 0
        %1452 = vmatprep.subr.mxu0 %v1450
        %1453 = vmatpush1.msra.mxu0 %v1447
        %1454 = vmatprep.subr.mxu0 0.0
        %1455 = vmatpush1.msra.mxu0 0.0
        %1456 = vmatprep.subr.mxu0 0.0
        %1457 = vmatpush1.msra.mxu0 0.0
        %1458 = vmatprep.subr.mxu0 0.0
        %1459 = vmatpush1.msra.mxu0 0.0
        %1460 = vmatprep.subr.mxu0 0.0
        %1461 = vmatpush1.msra.mxu0 0.0
        %1462 = vmatprep.subr.mxu0 0.0
        %1463 = vmatpush1.msra.mxu0 0.0
        %1464 = vmatprep.subr.mxu0 0.0
        %1465 = vmatpush1.msra.mxu0 0.0
        %1466 = vmatprep.subr.mxu0 0.0
        %1467 = vmatpush1.msra.mxu0 0.0
        %1468 = vmatprep.subr.mxu0 0.0
        %1469 = vmatpush1.msra.mxu0 0.0
        %1470 = vmatprep.subr.mxu0 0.0
        %1471 = vmatpush1.msra.mxu0 0.0
        %1472 = vmatprep.subr.mxu0 0.0
        %1473 = vmatpush1.msra.mxu0 0.0
        %1474 = vmatprep.subr.mxu0 0.0
        %1475 = vmatpush1.msra.mxu0 0.0
        %1476 = vmatprep.subr.mxu0 0.0
        %1477 = vmatpush1.msra.mxu0 0.0
        %1478 = vmatprep.subr.mxu0 0.0
        %1479 = vmatpush1.msra.mxu0 0.0
        %1480 = vmatprep.subr.mxu0 0.0
        %1481 = vmatpush1.msra.mxu0 0.0
        %1482 = vmatprep.subr.mxu0 0.0
        %1483 = vmatpush1.msra.mxu0 0.0
        %1484 = vmatprep.subr.mxu0 0.0
        %1485 = vmatpush1.msra.mxu0 0.0
        %1486 = vmatprep.subr.mxu0 0.0
        %1487 = vmatpush1.msra.mxu0 0.0
        %1488 = vmatprep.subr.mxu0 0.0
        %1489 = vmatpush1.msra.mxu0 0.0
        %1490 = vmatprep.subr.mxu0 0.0
        %1491 = vmatpush1.msra.mxu0 0.0
        %1492 = vmatprep.subr.mxu0 0.0
        %1493 = vmatpush1.msra.mxu0 0.0
        %1494 = vmatprep.subr.mxu0 0.0
        %1495 = vmatpush1.msra.mxu0 0.0
        %1496 = vmatprep.subr.mxu0 0.0
        %1497 = vmatpush1.msra.mxu0 0.0
        %1498 = vmatprep.subr.mxu0 0.0
        %1499 = vmatpush1.msra.mxu0 0.0
        %1500 = vmatprep.subr.mxu0 0.0
        %1501 = vmatpush1.msra.mxu0 0.0
        %1502 = vmatprep.subr.mxu0 0.0
        %1503 = vmatpush1.msra.mxu0 0.0
        %1504 = vmatprep.subr.mxu0 0.0
        %1505 = vmatpush1.msra.mxu0 0.0
        %1506 = vmatprep.subr.mxu0 0.0
        %1507 = vmatpush1.msra.mxu0 0.0
        %1508 = vmatprep.subr.mxu0 0.0
        %1509 = vmatpush1.msra.mxu0 0.0
        %1510 = vmatprep.subr.mxu0 0.0
        %1511 = vmatpush1.msra.mxu0 0.0
        %1512 = vmatprep.subr.mxu0 0.0
        %1513 = vmatpush1.msra.mxu0 0.0
        %1514 = vmatprep.subr.mxu0 0.0
        %1515 = vmatpush1.msra.mxu0 0.0
        %1516 = vmatprep.mubr.f32.mxu0 0.0
        %1517 = vmatmul.mubr.f32.gmra.mrb[0].mxu0 %v1444
        %v1518 = vpop.f32.mrb[0].mxu0
        %v1519 = vadd.f32 %v1441, %v1518
        %v1520 = vpop.f32.mrb[0].mxu0
        %v1521 = vadd.f32 %v1441, %v1520
        %1522 = vdwg.mxu0
        %v1523 = vmax.f32 %v1519, 0.0
        %v1524 = vmax.f32 %v1521, 0.0
        %1525 = vst [vmem:[%s379 + $0x30] sm:$0xff] %v1523
        %1526 = vst [vmem:[%s379 + $0x38] sm:$0xff] %v1524
        %s1527 = sand.u32 %s269, 1
        %s1528 = scalar_lea.sflag [#allocation5], %s1527
        %s1529 = sand.u32 %s269, 1
        %s1530 = smul.addr %s1529, 64
        %s1531 = scalar_lea.vmem [#allocation4], %s1530
        // Predicated region
        $region65: #{tpu_custom_call.1} parent=63 // pred_check
          %p1532 = pneg %p279
        $region66: #{tpu_custom_call.1} parent=63 // pred_check_branch
          %1534 = sbr.rel (%p1532) target = $region68
        $region67: #{tpu_custom_call.1} parent=63 // pred_region
          %s1536 = ssub.s32 1024, 1024
          %1537 = vsyncadd %s1528, %s1536
          %s1538 = smul.addr %s25, 8
          %s1539 = smul.addr %s1538, 128
          %s1540 = scalar_lea.hbm %s11, %s1539
          %s1541 = sshll.u32 %s1531, 4
          %s1542 = int_to_ptr.vmem [resolvable:$true] %s1541
          %1547 = dma.vmem_to_hbm [thread:$0]  %s1542, 1024, %s1540, %s1528, 256, 256, 16
        $region68: #{tpu_custom_call.1} parent=63 // pred_fallthru
          _
      $region64: #{tpu_custom_call.1} parent=5 // pred_fallthru
        _
      %p1548 = scmp.le.s32.totalorder 2, %s20
      // Predicated region
      $region69: #{tpu_custom_call.1} parent=5 // pred_check
        %p1549 = pneg %p1548
      $region70: #{tpu_custom_call.1} parent=5 // pred_check_branch
        %1551 = sbr.rel (%p1549) target = $region72
      $region71: #{tpu_custom_call.1} parent=5 // pred_region
        %s1552 = ssub.s32 %s20, 2
        // Predicated region
        $region73: #{tpu_custom_call.1} parent=71 // pred_check
          %p1553 = pneg %p285
        $region74: #{tpu_custom_call.1} parent=71 // pred_check_branch
          %1555 = sbr.rel (%p1553) target = $region76
        $region75: #{tpu_custom_call.1} parent=71 // pred_region
          %s1556 = sand.u32 %s270, 1
          %s1557 = scalar_lea.sflag [#allocation5], %s1556
          %s1558 = sand.u32 %s270, 1
          %s1559 = smul.addr %s1558, 64
          %s1560 = scalar_lea.vmem [#allocation4], %s1559
          %1561 = dma.done %s1557, 1024
        $region76: #{tpu_custom_call.1} parent=71 // pred_fallthru
          _
      $region72: #{tpu_custom_call.1} parent=5 // pred_fallthru
        _
    $region6: #{tpu_custom_call.1} parent=1 // loop_footer
      %s24 = sadd.s32 1, %s20
    $region7: #{tpu_custom_call.1} parent=1 // loop_footer_branch
      %19 = sbr.rel target = $region3
    $region8: #{tpu_custom_call.1} parent=1 // loop_exit
      _
    %1562 = vsyncpa [#allocation5], 1
    %s1563 = scalar_lea.sflag [#allocation5], 1
    %1564 = vsyncpa %s1563, 1

</llo_original>
